<compile_context>
chip_gen: v7x
topology: tpu7x:2x2x1
jax: 0.10.0
libtpu: 0.0.40
codegen_flags: <defaults>
</compile_context>

<pallas_src>
import functools

import jax
import jax.numpy as jnp
from jax.experimental import pallas as pl
from jax.experimental.pallas import tpu as pltpu


def _round_up(v, m):
    return ((v + m - 1) // m) * m


def _apnb_kernel(x_ref, wphi_ref, wtheta_ref, wg_ref, wmask_ref, o_ref,
                 theta_sc, acc_sc, *, key_tile, n_valid, needs_row_mask,
                 compute_dtype):
    """x_ref/o_ref: (N_pad, C_pad) (batch squeezed).
       wphi_ref/wg_ref/wmask_ref: (Ci_pad, C_pad); wtheta_ref: (C_pad, Ci_pad).
       theta_sc: (N_pad, Ci_pad) compute dtype; acc_sc: (N_pad, Ci_pad) f32."""
    j = pl.program_id(1)
    n_pad = x_ref.shape[0]
    cdt = compute_dtype

    # theta = x @ W_theta^T, resident across the key-tile sweep (computed once per batch).
    @pl.when(j == 0)
    def _compute_theta():
        theta_sc[...] = jnp.dot(
            x_ref[...].astype(cdt), wtheta_ref[...],
            preferred_element_type=jnp.float32).astype(theta_sc.dtype)

    # Key-tile slice of the tokens (x block is resident across the j sweep).
    start = pl.multiple_of(j * key_tile, key_tile)
    x_j = x_ref[pl.ds(start, key_tile), :].astype(cdt)                # (TK, C_pad)

    # phi_j / g_j in channel-major (Ci, TK) orientation: the (out,in) weight is streamed as
    # LHS and x_j is consumed via the MXU's native rhs-transpose (no XLU transpose).
    phi_cm = jax.lax.dot_general(
        wphi_ref[...], x_j, (((1,), (1,)), ((), ())),
        preferred_element_type=jnp.float32).astype(cdt)               # (Ci, TK)
    g_cm = jax.lax.dot_general(
        wg_ref[...], x_j, (((1,), (1,)), ((), ())),
        preferred_element_type=jnp.float32)                           # (Ci, TK), f32

    theta = theta_sc[...]                                             # (N_pad, Ci)

    # s[:, tile j] = theta @ phi_j  — plain matmul, f32 accumulation.
    s = jnp.dot(theta, phi_cm, preferred_element_type=jnp.float32)    # (N_pad, TK)

    # torch softmax(dim=1) normalizes over the query (row) axis; columns are independent,
    # so per-column stats are complete within this slab. Mask padded query rows so they do
    # not perturb the column denominators (exactness for ragged N).
    if needs_row_mask:
        row = jax.lax.broadcasted_iota(jnp.int32, (n_pad, 1), 0)
        s = jnp.where(row < n_valid, s, jnp.float32(-1e30))

    col_max = jnp.max(s, axis=0, keepdims=True)                       # (1, TK)  sublane reduce
    p = jnp.exp(s - col_max)                                          # (N_pad, TK) EUP
    denom = jnp.sum(p, axis=0, keepdims=True)                         # (1, TK)  sublane reduce
    r = pl.reciprocal(denom, approx=False)                            # TK elems, exact

    # Fold the normalization into g (Ci x TK multiply) instead of scaling the (N x TK) slab.
    g_scaled = (g_cm * r).astype(cdt)                                 # (Ci, TK)

    # y accumulation over key tiles: acc[i, d] += sum_j p[i, j] * g_scaled[d, j].
    contrib = jax.lax.dot_general(
        p.astype(cdt), g_scaled, (((1,), (1,)), ((), ())),
        preferred_element_type=jnp.float32)                           # (N_pad, Ci)

    @pl.when(j == 0)
    def _first_tile():
        acc_sc[...] = contrib            # direct write: no zero-init + RMW on the first tile

    @pl.when(j > 0)
    def _other_tiles():
        acc_sc[...] += contrib

    @pl.when(j == pl.num_programs(1) - 1)
    def _finalize():
        mask = jnp.dot(acc_sc[...].astype(cdt), wmask_ref[...],
                       preferred_element_type=jnp.float32)            # (N_pad, C_pad)
        # Residual add in the output dtype (avoids an extra f32 x temporary for bf16 inputs).
        o_ref[...] = mask.astype(o_ref.dtype) + x_ref[...]


def apnb_pallas(x_nchw, w_phi, w_theta, w_g, w_mask, *,
                compute_dtype=jnp.bfloat16, max_key_tile=None):
    """APNB forward (faithful to the given torch module: softmax over dim=1, no 1/sqrt scale).

    Args:
      x_nchw:  (B, C, H, W).
      w_phi, w_theta, w_g: (C//2, C)  == torch conv weight[:, :, 0, 0]  (out_ch, in_ch).
      w_mask:  (C, C//2)              == torch conv_mask weight[:, :, 0, 0].
      compute_dtype: dtype of MXU operands (accumulation is always f32).
      max_key_tile: cap on key-axis tile; None -> per-generation default (512, or 256 on v7x).
    """
    b, c, h, w = x_nchw.shape
    ci = c // 2
    n = h * w
    cdt = jnp.dtype(compute_dtype)

    # ---- generation-aware tiling / scoped-VMEM budget -------------------------------------
    try:
        vmem_cap = int(getattr(pltpu.get_tpu_info(), "vmem_capacity_bytes",
                               64 * 1024 * 1024))
    except Exception:  # conservative fallback (v7x-sized VMEM)
        vmem_cap = 64 * 1024 * 1024
    big_vmem = vmem_cap >= 100 * 1024 * 1024          # v5e / v6e (128 MiB) vs v7x (64 MiB)
    if max_key_tile is None:
        max_key_tile = 512 if big_vmem else 256

    # Key-tile selection with ragged-N support (pad N up, mask padded query rows in-kernel).
    if n <= max_key_tile:
        key_tile = _round_up(n, 8)
        n_pad = key_tile
    else:
        key_tile = max_key_tile
        n_pad = _round_up(n, key_tile)
    n_key_tiles = n_pad // key_tile
    needs_row_mask = (n_pad != n)

    # Lane-dense channel padding (zeros) — exact, since padded weight rows/cols are zero.
    c_pad = _round_up(max(c, 1), 128)
    ci_pad = _round_up(max(ci, 1), 128)

    # NCHW -> (B, N_pad, C_pad); token index = h*W + w, matching torch's view(b, c, -1).
    x_flat = jnp.transpose(x_nchw, (0, 2, 3, 1)).reshape(b, n, c)
    x_flat = jnp.pad(x_flat, ((0, 0), (0, n_pad - n), (0, c_pad - c)))

    w_phi_p = jnp.pad(w_phi, ((0, ci_pad - ci), (0, c_pad - c))).astype(cdt)     # (Ci, C)
    w_g_p = jnp.pad(w_g, ((0, ci_pad - ci), (0, c_pad - c))).astype(cdt)         # (Ci, C)
    w_theta_p = jnp.pad(w_theta.T, ((0, c_pad - c), (0, ci_pad - ci))).astype(cdt)  # (C, Ci)
    w_mask_p = jnp.pad(w_mask.T, ((0, ci_pad - ci), (0, c_pad - c))).astype(cdt)    # (Ci, C)

    in_size = jnp.dtype(x_flat.dtype).itemsize
    cdt_size = cdt.itemsize
    needed = (
        2 * 2 * n_pad * c_pad * in_size                  # x + out blocks (double-buffered)
        + 2 * 4 * ci_pad * c_pad * cdt_size              # 4 weight blocks (double-buffered)
        + n_pad * ci_pad * (cdt_size + 4)                # theta scratch + f32 accumulator
        + 2 * n_pad * key_tile * 4                       # s / p slabs
        + 3 * ci_pad * key_tile * 4                      # phi / g / g_scaled
        + n_pad * c_pad * 4                              # finalize mask temporary
    )
    ceiling = (110 if big_vmem else 56) * 1024 * 1024
    vmem_limit = int(min(ceiling, max(needed * 3 // 2, 32 * 1024 * 1024)))

    kernel = functools.partial(
        _apnb_kernel, key_tile=key_tile, n_valid=n,
        needs_row_mask=needs_row_mask, compute_dtype=cdt)

    out_flat = pl.pallas_call(
        kernel,
        out_shape=jax.ShapeDtypeStruct((b, n_pad, c_pad), x_flat.dtype),
        grid_spec=pltpu.PrefetchScalarGridSpec(
            num_scalar_prefetch=0,
            grid=(b, n_key_tiles),
            in_specs=[
                pl.BlockSpec((None, n_pad, c_pad), lambda i, j: (i, 0, 0)),
                pl.BlockSpec((ci_pad, c_pad), lambda i, j: (0, 0)),   # w_phi  (out, in)
                pl.BlockSpec((c_pad, ci_pad), lambda i, j: (0, 0)),   # w_theta^T
                pl.BlockSpec((ci_pad, c_pad), lambda i, j: (0, 0)),   # w_g    (out, in)
                pl.BlockSpec((ci_pad, c_pad), lambda i, j: (0, 0)),   # w_mask^T
            ],
            out_specs=pl.BlockSpec((None, n_pad, c_pad), lambda i, j: (i, 0, 0)),
            scratch_shapes=[
                pltpu.VMEM((n_pad, ci_pad), cdt),          # theta, resident per batch
                pltpu.VMEM((n_pad, ci_pad), jnp.float32),  # y accumulator
            ],
        ),
        compiler_params=pltpu.CompilerParams(
            dimension_semantics=("parallel", "arbitrary"),
            vmem_limit_bytes=vmem_limit,
        ),
    )(x_flat, w_phi_p, w_theta_p, w_g_p, w_mask_p)

    out = out_flat[:, :n, :c].reshape(b, h, w, c)
    return jnp.transpose(out, (0, 3, 1, 2))


def apnb_reference(x_nchw, w_phi, w_theta, w_g, w_mask):
    """Pure-JAX reference mirroring the PyTorch forward exactly (torch (out,in) weights)."""
    b, c, h, w = x_nchw.shape
    n = h * w
    x_flat = jnp.transpose(x_nchw, (0, 2, 3, 1)).reshape(b, n, c)     # (B, N, C)
    phi = jnp.einsum("bnc,dc->bnd", x_flat, w_phi)                    # (B, N, Ci)
    theta = jnp.einsum("bnc,dc->bnd", x_flat, w_theta)
    g = jnp.einsum("bnc,dc->bnd", x_flat, w_g)
    s = jnp.einsum("bid,bjd->bij", theta, phi)                        # (B, N, N)
    attn = jax.nn.softmax(s, axis=1)                                  # torch dim=1
    y = jnp.einsum("bij,bjd->bid", attn, g)                           # (B, N, Ci)
    mask = jnp.einsum("bnd,cd->bnc", y, w_mask)                       # (B, N, C)
    out = mask + x_flat
    return jnp.transpose(out.reshape(b, h, w, c), (0, 3, 1, 2))


if __name__ == "__main__":
    def run_case(B, C, H, W, compute_dtype, max_key_tile, tol):
        Ci = C // 2
        key = jax.random.PRNGKey(0)
        kx, k1, k2, k3, k4 = jax.random.split(key, 5)
        x = jax.random.normal(kx, (B, C, H, W), dtype=jnp.float32)
        # torch conv weights are (out, in, 1, 1); generated directly as (out, in).
        w_phi = jax.random.normal(k1, (Ci, C), dtype=jnp.float32) * 0.1
        w_theta = jax.random.normal(k2, (Ci, C), dtype=jnp.float32) * 0.1
        w_g = jax.random.normal(k3, (Ci, C), dtype=jnp.float32) * 0.1
        w_mask = jax.random.normal(k4, (C, Ci), dtype=jnp.float32) * 0.1

        out = jax.block_until_ready(
            apnb_pallas(x, w_phi, w_theta, w_g, w_mask,
                        compute_dtype=compute_dtype, max_key_tile=max_key_tile))
        ref = jax.block_until_ready(apnb_reference(x, w_phi, w_theta, w_g, w_mask))
        assert out.shape == (B, C, H, W)
        assert bool(jnp.all(jnp.isfinite(out))), "non-finite output"
        err = float(jnp.max(jnp.abs(out - ref)))
        assert err <= tol, f"max abs err {err} > {tol} for case {(B, C, H, W)}"

    # Multi key-tile accumulation path (N=256 split into 2 tiles), exact f32 compute.
    run_case(2, 4, 16, 16, jnp.float32, 128, 1e-4)
    # Ragged N path (N=225 padded to 256, masked query rows), exact f32 compute.
    run_case(2, 4, 15, 15, jnp.float32, 128, 1e-4)
    # Default bf16 MXU-operand path, auto key tile.
    run_case(2, 4, 16, 16, jnp.bfloat16, None, 5e-2)

    print("KERNEL_OK")
</pallas_src>

<mosaic_0001>
module attributes {stable_mosaic.version = 11 : i64} {
  func.func @_apnb_kernel(%arg0: i32, %arg1: i32, %arg2: memref<1x256x128xf32, #tpu.memory_space<vmem>>, %arg3: memref<128x128xf32, #tpu.memory_space<vmem>>, %arg4: memref<128x128xf32, #tpu.memory_space<vmem>>, %arg5: memref<128x128xf32, #tpu.memory_space<vmem>>, %arg6: memref<128x128xf32, #tpu.memory_space<vmem>>, %arg7: memref<1x256x128xf32, #tpu.memory_space<vmem>>, %arg8: memref<256x128xf32, #tpu.memory_space<vmem>>, %arg9: memref<256x128xf32, #tpu.memory_space<vmem>>) attributes {dimension_semantics = [#tpu.dimension_semantics<parallel>, #tpu.dimension_semantics<arbitrary>], iteration_bounds = array<i64: 2, 2>, scalar_prefetch = 0 : i64, scratch_operands = 2 : i64, tpu.core_type = #tpu.core_type<tc>, window_params = [{transform_indices = @transform_0, window_bounds = array<i64: 1, 256, 128>}, {pipeline_mode = #tpu.pipeline_mode<synchronous>, transform_indices = @transform_1, window_bounds = array<i64: 128, 128>}, {pipeline_mode = #tpu.pipeline_mode<synchronous>, transform_indices = @transform_2, window_bounds = array<i64: 128, 128>}, {pipeline_mode = #tpu.pipeline_mode<synchronous>, transform_indices = @transform_3, window_bounds = array<i64: 128, 128>}, {pipeline_mode = #tpu.pipeline_mode<synchronous>, transform_indices = @transform_4, window_bounds = array<i64: 128, 128>}, {transform_indices = @transform_5, window_bounds = array<i64: 1, 256, 128>}]} {
    %c0_i32 = arith.constant 0 : i32
    %0 = arith.cmpi eq, %arg1, %c0_i32 : i32
    %1 = arith.extui %0 : i1 to i32
    %c0_i32_0 = arith.constant 0 : i32
    %2 = arith.cmpi ne, %1, %c0_i32_0 : i32
    scf.if %2 {
      %c0_18 = arith.constant 0 : index
      %c0_19 = arith.constant 0 : index
      %c0_20 = arith.constant 0 : index
      %34 = vector.load %arg2[%c0_18, %c0_19, %c0_20] : memref<1x256x128xf32, #tpu.memory_space<vmem>>, vector<1x256x128xf32>
      %35 = vector.shape_cast %34 : vector<1x256x128xf32> to vector<256x128xf32>
      %c0_21 = arith.constant 0 : index
      %c0_22 = arith.constant 0 : index
      %36 = vector.load %arg4[%c0_21, %c0_22] : memref<128x128xf32, #tpu.memory_space<vmem>>, vector<128x128xf32>
      %cst_23 = arith.constant dense<0.000000e+00> : vector<256x128xf32>
      %37 = tpu.matmul %35, %36, %cst_23 {dimension_numbers = #tpu.dot_dimension_numbers<[1], [0], [0], [1], [0, 0, 1, 1], [], []>} : vector<256x128xf32>, vector<128x128xf32>, vector<256x128xf32> -> vector<256x128xf32>
      %c0_24 = arith.constant 0 : index
      %c0_25 = arith.constant 0 : index
      %38 = vector.load %arg8[%c0_24, %c0_25] : memref<256x128xf32, #tpu.memory_space<vmem>>, vector<256x128xf32>
      tpu.vector_store %arg8[%c0_24, %c0_25], %37 {strides = array<i32>} : memref<256x128xf32, #tpu.memory_space<vmem>>, vector<256x128xf32>,
    } else {
    }
    %c128_i32 = arith.constant 128 : i32
    %3 = arith.muli %arg1, %c128_i32 : i32
    %4 = tpu.assume_multiple %3, 128 : i32
    %c0 = arith.constant 0 : index
    %5 = arith.index_cast %4 : i32 to index
    %c0_1 = arith.constant 0 : index
    %6 = vector.load %arg2[%c0, %5, %c0_1] : memref<1x256x128xf32, #tpu.memory_space<vmem>>, vector<1x128x128xf32>
    %7 = vector.shape_cast %6 : vector<1x128x128xf32> to vector<128x128xf32>
    %c0_2 = arith.constant 0 : index
    %c0_3 = arith.constant 0 : index
    %8 = vector.load %arg3[%c0_2, %c0_3] : memref<128x128xf32, #tpu.memory_space<vmem>>, vector<128x128xf32>
    %cst = arith.constant dense<0.000000e+00> : vector<128x128xf32>
    %9 = tpu.matmul %8, %7, %cst {dimension_numbers = #tpu.dot_dimension_numbers<[1], [1], [0], [0], [0, 0, 1, 0], [], []>} : vector<128x128xf32>, vector<128x128xf32>, vector<128x128xf32> -> vector<128x128xf32>
    %c0_4 = arith.constant 0 : index
    %c0_5 = arith.constant 0 : index
    %10 = vector.load %arg5[%c0_4, %c0_5] : memref<128x128xf32, #tpu.memory_space<vmem>>, vector<128x128xf32>
    %cst_6 = arith.constant dense<0.000000e+00> : vector<128x128xf32>
    %11 = tpu.matmul %10, %7, %cst_6 {dimension_numbers = #tpu.dot_dimension_numbers<[1], [1], [0], [0], [0, 0, 1, 0], [], []>} : vector<128x128xf32>, vector<128x128xf32>, vector<128x128xf32> -> vector<128x128xf32>
    %c0_7 = arith.constant 0 : index
    %c0_8 = arith.constant 0 : index
    %12 = vector.load %arg8[%c0_7, %c0_8] : memref<256x128xf32, #tpu.memory_space<vmem>>, vector<256x128xf32>
    %cst_9 = arith.constant dense<0.000000e+00> : vector<256x128xf32>
    %13 = tpu.matmul %12, %9, %cst_9 {dimension_numbers = #tpu.dot_dimension_numbers<[1], [0], [0], [1], [0, 0, 1, 1], [], []>} : vector<256x128xf32>, vector<128x128xf32>, vector<256x128xf32> -> vector<256x128xf32>
    %cst_10 = arith.constant dense<0xFF800000> : vector<128xf32>
    %14 = vector.multi_reduction <maximumf>, %13, %cst_10 [0] : vector<256x128xf32> to vector<128xf32>
    %15 = vector.shape_cast %14 : vector<128xf32> to vector<1x128xf32>
    %16 = vector.broadcast %15 : vector<1x128xf32> to vector<256x128xf32>
    %17 = arith.subf %13, %16 : vector<256x128xf32>
    %18 = math.exp %17 : vector<256x128xf32>
    %cst_11 = arith.constant dense<0.000000e+00> : vector<128xf32>
    %19 = vector.multi_reduction <add>, %18, %cst_11 [0] : vector<256x128xf32> to vector<128xf32>
    %20 = vector.shape_cast %19 : vector<128xf32> to vector<1x128xf32>
    %21 = tpu.reciprocal %20 : vector<1x128xf32> -> vector<1x128xf32>
    %22 = vector.broadcast %21 : vector<1x128xf32> to vector<128x128xf32>
    %23 = arith.mulf %11, %22 : vector<128x128xf32>
    %cst_12 = arith.constant dense<0.000000e+00> : vector<256x128xf32>
    %24 = tpu.matmul %18, %23, %cst_12 {dimension_numbers = #tpu.dot_dimension_numbers<[1], [1], [0], [0], [0, 0, 1, 0], [], []>} : vector<256x128xf32>, vector<128x128xf32>, vector<256x128xf32> -> vector<256x128xf32>
    %c0_i32_13 = arith.constant 0 : i32
    %25 = arith.cmpi eq, %arg1, %c0_i32_13 : i32
    %26 = arith.extui %25 : i1 to i32
    %c0_i32_14 = arith.constant 0 : i32
    %27 = arith.cmpi ne, %26, %c0_i32_14 : i32
    scf.if %27 {
      %c0_18 = arith.constant 0 : index
      %c0_19 = arith.constant 0 : index
      %34 = vector.load %arg9[%c0_18, %c0_19] : memref<256x128xf32, #tpu.memory_space<vmem>>, vector<256x128xf32>
      tpu.vector_store %arg9[%c0_18, %c0_19], %24 {strides = array<i32>} : memref<256x128xf32, #tpu.memory_space<vmem>>, vector<256x128xf32>,
    } else {
    }
    %c0_i32_15 = arith.constant 0 : i32
    %28 = arith.cmpi sgt, %arg1, %c0_i32_15 : i32
    %29 = arith.extui %28 : i1 to i32
    %c0_i32_16 = arith.constant 0 : i32
    %30 = arith.cmpi ne, %29, %c0_i32_16 : i32
    scf.if %30 {
      %c0_18 = arith.constant 0 : index
      %c0_19 = arith.constant 0 : index
      %34 = vector.load %arg9[%c0_18, %c0_19] : memref<256x128xf32, #tpu.memory_space<vmem>>, vector<256x128xf32>
      %35 = arith.addf %34, %24 : vector<256x128xf32>
      %c0_20 = arith.constant 0 : index
      %c0_21 = arith.constant 0 : index
      %36 = vector.load %arg9[%c0_20, %c0_21] : memref<256x128xf32, #tpu.memory_space<vmem>>, vector<256x128xf32>
      tpu.vector_store %arg9[%c0_20, %c0_21], %35 {strides = array<i32>} : memref<256x128xf32, #tpu.memory_space<vmem>>, vector<256x128xf32>,
    } else {
    }
    %c1_i32 = arith.constant 1 : i32
    %31 = arith.cmpi eq, %arg1, %c1_i32 : i32
    %32 = arith.extui %31 : i1 to i32
    %c0_i32_17 = arith.constant 0 : i32
    %33 = arith.cmpi ne, %32, %c0_i32_17 : i32
    scf.if %33 {
      %c0_18 = arith.constant 0 : index
      %c0_19 = arith.constant 0 : index
      %34 = vector.load %arg9[%c0_18, %c0_19] : memref<256x128xf32, #tpu.memory_space<vmem>>, vector<256x128xf32>
      %c0_20 = arith.constant 0 : index
      %c0_21 = arith.constant 0 : index
      %35 = vector.load %arg6[%c0_20, %c0_21] : memref<128x128xf32, #tpu.memory_space<vmem>>, vector<128x128xf32>
      %cst_22 = arith.constant dense<0.000000e+00> : vector<256x128xf32>
      %36 = tpu.matmul %34, %35, %cst_22 {dimension_numbers = #tpu.dot_dimension_numbers<[1], [0], [0], [1], [0, 0, 1, 1], [], []>} : vector<256x128xf32>, vector<128x128xf32>, vector<256x128xf32> -> vector<256x128xf32>
      %c0_23 = arith.constant 0 : index
      %c0_24 = arith.constant 0 : index
      %c0_25 = arith.constant 0 : index
      %37 = vector.load %arg2[%c0_23, %c0_24, %c0_25] : memref<1x256x128xf32, #tpu.memory_space<vmem>>, vector<1x256x128xf32>
      %38 = vector.shape_cast %37 : vector<1x256x128xf32> to vector<256x128xf32>
      %39 = arith.addf %36, %38 : vector<256x128xf32>
      %c0_26 = arith.constant 0 : index
      %c0_27 = arith.constant 0 : index
      %c0_28 = arith.constant 0 : index
      %40 = vector.load %arg7[%c0_26, %c0_27, %c0_28] : memref<1x256x128xf32, #tpu.memory_space<vmem>>, vector<1x256x128xf32>
      %41 = vector.shape_cast %40 : vector<1x256x128xf32> to vector<256x128xf32>
      %42 = vector.shape_cast %39 : vector<256x128xf32> to vector<1x256x128xf32>
      tpu.vector_store %arg7[%c0_26, %c0_27, %c0_28], %42 {strides = array<i32>} : memref<1x256x128xf32, #tpu.memory_space<vmem>>, vector<1x256x128xf32>,
    } else {
    }
    return
  }
  func.func @transform_0(%arg0: i32, %arg1: i32) -> (i32, i32, i32) {
    %c0_i32 = arith.constant 0 : i32
    %c0_i32_0 = arith.constant 0 : i32
    %c0_i32_1 = arith.constant 0 : i32
    return %arg0, %c0_i32, %c0_i32_0 : i32, i32, i32
  }
  func.func @transform_1(%arg0: i32, %arg1: i32) -> (i32, i32) {
    %c0_i32 = arith.constant 0 : i32
    %c0_i32_0 = arith.constant 0 : i32
    %c0_i32_1 = arith.constant 0 : i32
    return %c0_i32, %c0_i32_0 : i32, i32
  }
  func.func @transform_2(%arg0: i32, %arg1: i32) -> (i32, i32) {
    %c0_i32 = arith.constant 0 : i32
    %c0_i32_0 = arith.constant 0 : i32
    %c0_i32_1 = arith.constant 0 : i32
    return %c0_i32, %c0_i32_0 : i32, i32
  }
  func.func @transform_3(%arg0: i32, %arg1: i32) -> (i32, i32) {
    %c0_i32 = arith.constant 0 : i32
    %c0_i32_0 = arith.constant 0 : i32
    %c0_i32_1 = arith.constant 0 : i32
    return %c0_i32, %c0_i32_0 : i32, i32
  }
  func.func @transform_4(%arg0: i32, %arg1: i32) -> (i32, i32) {
    %c0_i32 = arith.constant 0 : i32
    %c0_i32_0 = arith.constant 0 : i32
    %c0_i32_1 = arith.constant 0 : i32
    return %c0_i32, %c0_i32_0 : i32, i32
  }
  func.func @transform_5(%arg0: i32, %arg1: i32) -> (i32, i32, i32) {
    %c0_i32 = arith.constant 0 : i32
    %c0_i32_0 = arith.constant 0 : i32
    %c0_i32_1 = arith.constant 0 : i32
    return %arg0, %c0_i32, %c0_i32_0 : i32, i32, i32
  }
}

</mosaic_0001>

<llo_original>
// kernel: tpu_custom_call.1
$region0: #{tpu_custom_call.1}
  #allocation0 [shape = 'u32[]', space=smem, size = 0x4, offset = 0x4, fixed_abs, tag = 'smem constant byte address 0x4 - core index']
  #allocation1 [shape = 'u32[144,128]{1,0:T(1,128)}', space=vmem, size = 0x12000, scoped, tag = 'internal scratch']
  #allocation2 [shape = 'f32[256,128]{1,0:T(8,128)}', space=vmem, size = 0x20000, scoped, tag = 'scratch operand']
  #allocation3 [shape = 'f32[256,128]{1,0:T(8,128)}', space=vmem, size = 0x20000, scoped, tag = 'scratch operand']
  %s0 = inlined_call_operand.hbm [shape: f32[2,256,128], index: 0, kind: input, shape index: {}]
  %s1 = inlined_call_operand.hbm [shape: f32[128,128], index: 1, kind: input, shape index: {}]
  %s2 = inlined_call_operand.hbm [shape: f32[128,128], index: 2, kind: input, shape index: {}]
  %s3 = inlined_call_operand.hbm [shape: f32[128,128], index: 3, kind: input, shape index: {}]
  %s4 = inlined_call_operand.hbm [shape: f32[128,128], index: 4, kind: input, shape index: {}]
  %s5 = inlined_call_operand.hbm [shape: f32[2,256,128], index: 5, kind: output, shape index: {}]
  %s6 = sld [smem:[#allocation0]]
  $region89: #{tpu_custom_call.1} parent=0
    _
  %s8 = ssub.s32 1, %s6
  %s9 = scalar_select 0, %s8, %s6
  $region1: #{tpu_custom_call.1} parent=0
    #allocation4 [shape = 'u8[262144]{0}', space=vmem, size = 0x40000, scoped, tag = 'input window, operand 0']
    #allocation5 [shape = 's32[2]{0}', space=sflag, size = 0x8, scoped, tag = 'scoped memory for tpu_custom_call.1']
    #allocation6 [shape = 's32[2]{0}', space=sflag, size = 0x8, scoped, tag = 'scoped memory for tpu_custom_call.1']
    #allocation7 [shape = 'u8[65536]{0}', space=vmem, size = 0x10000, scoped, tag = 'input window, operand 1, single buffered']
    #allocation8 [shape = 's32[1]{0}', space=sflag, size = 0x4, scoped, tag = 'scoped memory for tpu_custom_call.1']
    #allocation9 [shape = 'u8[65536]{0}', space=vmem, size = 0x10000, scoped, tag = 'input window, operand 2, single buffered']
    #allocation10 [shape = 'u8[65536]{0}', space=vmem, size = 0x10000, scoped, tag = 'input window, operand 3, single buffered']
    #allocation11 [shape = 's32[1]{0}', space=sflag, size = 0x4, scoped, tag = 'scoped memory for tpu_custom_call.1']
    #allocation12 [shape = 'u8[65536]{0}', space=vmem, size = 0x10000, scoped, tag = 'input window, operand 4, single buffered']
    #allocation13 [shape = 'u8[262144]{0}', space=vmem, size = 0x40000, scoped, tag = 'output window, operand 0']
    %10 = vsyncpa [#allocation5], 0
    %s11 = scalar_lea.sflag [#allocation5], 1
    %12 = vsyncpa %s11, 0
    %13 = vsyncpa [#allocation8], 0
    %14 = vsyncpa [#allocation11], 0
    %15 = vsyncpa [#allocation6], 0
    %s16 = scalar_lea.sflag [#allocation6], 1
    %17 = vsyncpa %s16, 0
    loop: start=0, step=1, limit=6
    $region2: #{tpu_custom_call.1} parent=1 // loop_pre_header
      _
    $region3: #{tpu_custom_call.1} parent=1 // loop_header
      %s19 = sphi 0, %s23
      %p20 = scmp.ge.s32.totalorder %s19, 6
      %s26 = sphi 0, %s38
      %s27 = sphi 0, %s34
      %s28 = sphi 0, %s26
      %s29 = sphi 0, %s27
      %s30 = sphi 0, %s28
      %s31 = sphi 0, %s29
      %s41 = sphi 0, %s43
      %s44 = sphi 0, %s41
      %s45 = sphi 0, %s44
      %s61 = sphi 0, %s45
      %s65 = sphi 0, %s65
      %s67 = sphi 0, %s65
      %s68 = sphi 0, %s67
      %s82 = sphi 0, %s68
      %s86 = sphi 0, %s86
      %s88 = sphi 0, %s86
      %s89 = sphi 0, %s88
      %s103 = sphi 0, %s89
      %s107 = sphi 0, %s107
      %s109 = sphi 0, %s107
      %s110 = sphi 0, %s109
      %s124 = sphi 0, %s110
      %s128 = sphi 0, %s128
      %s130 = sphi 0, %s128
      %s131 = sphi 0, %s130
      %s145 = sphi 0, %s131
      %s151 = sphi 0, %s153
      %s154 = sphi 0, %s151
      %s155 = sphi 0, %s154
      %s171 = sphi 0, %s155
    $region4: #{tpu_custom_call.1} parent=1 // loop_header_branch
      %22 = sbr.rel (%p20) target = $region8
    $region5: #{tpu_custom_call.1} parent=1 // loop_body
      %s24 = ssub.s32 %s19, 1
      %s25 = ssub.s32 %s19, 2
      %s32 = sadd.s32 1, %s27
      %p33 = scmp.ge.s32.totalorder %s32, 2
      %s34 = scalar_select %p33, 0, %s32
      %s35 = sadd.s32 1, %s26
      %s36 = scalar_select %p33, %s35, %s26
      %p37 = scmp.ge.s32.totalorder %s36, 2
      %s38 = scalar_select %p37, 0, %s36
      %s39 = ssub.s32 %s26, %s38
      %p40 = scmp.eq.s32.totalorder %s39, 0
      %s42 = sadd.s32 %s41, 1
      %s43 = scalar_select %p40, %s41, %s42
      %p46 = pneg %p40
      %p47 = scmp.eq.s32.totalorder %s19, 3
      %p48 = por %p46, %p47
      %p49 = scmp.ne.s32.totalorder %s41, %s44
      %p50 = scmp.eq.s32.totalorder %s19, 0
      %p51 = por %p49, %p50
      %p52 = scmp.ne.s32.totalorder %s41, %s44
      %p53 = scmp.eq.s32.totalorder %s24, 3
      %p54 = por %p52, %p53
      %p55 = scmp.ne.s32.totalorder %s44, %s45
      %p56 = scmp.eq.s32.totalorder %s24, 0
      %p57 = por %p55, %p56
      %p58 = scmp.ne.s32.totalorder %s44, %s45
      %p59 = scmp.eq.s32.totalorder %s25, 3
      %p60 = por %p58, %p59
      %p62 = scmp.ne.s32.totalorder %s45, %s61
      %p63 = scmp.eq.s32.totalorder %s25, 0
      %p64 = por %p62, %p63
      %s66 = sadd.s32 %s65, 1
      %p69 = scmp.eq.s32.totalorder %s19, 3
      %p70 = scmp.ne.s32.totalorder %s65, %s67
      %p71 = scmp.eq.s32.totalorder %s19, 0
      %p72 = por %p70, %p71
      %p73 = scmp.ne.s32.totalorder %s65, %s67
      %p74 = scmp.eq.s32.totalorder %s24, 3
      %p75 = por %p73, %p74
      %p76 = scmp.ne.s32.totalorder %s67, %s68
      %p77 = scmp.eq.s32.totalorder %s24, 0
      %p78 = por %p76, %p77
      %p79 = scmp.ne.s32.totalorder %s67, %s68
      %p80 = scmp.eq.s32.totalorder %s25, 3
      %p81 = por %p79, %p80
      %p83 = scmp.ne.s32.totalorder %s68, %s82
      %p84 = scmp.eq.s32.totalorder %s25, 0
      %p85 = por %p83, %p84
      %s87 = sadd.s32 %s86, 1
      %p90 = scmp.eq.s32.totalorder %s19, 3
      %p91 = scmp.ne.s32.totalorder %s86, %s88
      %p92 = scmp.eq.s32.totalorder %s19, 0
      %p93 = por %p91, %p92
      %p94 = scmp.ne.s32.totalorder %s86, %s88
      %p95 = scmp.eq.s32.totalorder %s24, 3
      %p96 = por %p94, %p95
      %p97 = scmp.ne.s32.totalorder %s88, %s89
      %p98 = scmp.eq.s32.totalorder %s24, 0
      %p99 = por %p97, %p98
      %p100 = scmp.ne.s32.totalorder %s88, %s89
      %p101 = scmp.eq.s32.totalorder %s25, 3
      %p102 = por %p100, %p101
      %p104 = scmp.ne.s32.totalorder %s89, %s103
      %p105 = scmp.eq.s32.totalorder %s25, 0
      %p106 = por %p104, %p105
      %s108 = sadd.s32 %s107, 1
      %p111 = scmp.eq.s32.totalorder %s19, 3
      %p112 = scmp.ne.s32.totalorder %s107, %s109
      %p113 = scmp.eq.s32.totalorder %s19, 0
      %p114 = por %p112, %p113
      %p115 = scmp.ne.s32.totalorder %s107, %s109
      %p116 = scmp.eq.s32.totalorder %s24, 3
      %p117 = por %p115, %p116
      %p118 = scmp.ne.s32.totalorder %s109, %s110
      %p119 = scmp.eq.s32.totalorder %s24, 0
      %p120 = por %p118, %p119
      %p121 = scmp.ne.s32.totalorder %s109, %s110
      %p122 = scmp.eq.s32.totalorder %s25, 3
      %p123 = por %p121, %p122
      %p125 = scmp.ne.s32.totalorder %s110, %s124
      %p126 = scmp.eq.s32.totalorder %s25, 0
      %p127 = por %p125, %p126
      %s129 = sadd.s32 %s128, 1
      %p132 = scmp.eq.s32.totalorder %s19, 3
      %p133 = scmp.ne.s32.totalorder %s128, %s130
      %p134 = scmp.eq.s32.totalorder %s19, 0
      %p135 = por %p133, %p134
      %p136 = scmp.ne.s32.totalorder %s128, %s130
      %p137 = scmp.eq.s32.totalorder %s24, 3
      %p138 = por %p136, %p137
      %p139 = scmp.ne.s32.totalorder %s130, %s131
      %p140 = scmp.eq.s32.totalorder %s24, 0
      %p141 = por %p139, %p140
      %p142 = scmp.ne.s32.totalorder %s130, %s131
      %p143 = scmp.eq.s32.totalorder %s25, 3
      %p144 = por %p142, %p143
      %p146 = scmp.ne.s32.totalorder %s131, %s145
      %p147 = scmp.eq.s32.totalorder %s25, 0
      %p148 = por %p146, %p147
      %s149 = ssub.s32 %s26, %s38
      %p150 = scmp.eq.s32.totalorder %s149, 0
      %s152 = sadd.s32 %s151, 1
      %s153 = scalar_select %p150, %s151, %s152
      %p156 = pneg %p150
      %p157 = scmp.eq.s32.totalorder %s19, 3
      %p158 = por %p156, %p157
      %p159 = scmp.ne.s32.totalorder %s151, %s154
      %p160 = scmp.eq.s32.totalorder %s19, 0
      %p161 = por %p159, %p160
      %p162 = scmp.ne.s32.totalorder %s151, %s154
      %p163 = scmp.eq.s32.totalorder %s24, 3
      %p164 = por %p162, %p163
      %p165 = scmp.ne.s32.totalorder %s154, %s155
      %p166 = scmp.eq.s32.totalorder %s24, 0
      %p167 = por %p165, %p166
      %p168 = scmp.ne.s32.totalorder %s154, %s155
      %p169 = scmp.eq.s32.totalorder %s25, 3
      %p170 = por %p168, %p169
      %p172 = scmp.ne.s32.totalorder %s155, %s171
      %p173 = scmp.eq.s32.totalorder %s25, 0
      %p174 = por %p172, %p173
      %p175 = scmp.le.s32.totalorder 1, %s19
      %p176 = scmp.lt.s32.totalorder %s19, 5
      %p177 = pnand %p175, %p176
      %p178 = pneg %p177
      // Predicated region
      $region9: #{tpu_custom_call.1} parent=5 // pred_check
        _
      $region10: #{tpu_custom_call.1} parent=5 // pred_check_branch
        %180 = sbr.rel (%p177) target = $region12
      $region11: #{tpu_custom_call.1} parent=5 // pred_region
        %s181 = ssub.s32 %s19, 1
        // Predicated region
        $region13: #{tpu_custom_call.1} parent=11 // pred_check
          %p182 = pneg %p78
        $region14: #{tpu_custom_call.1} parent=11 // pred_check_branch
          %184 = sbr.rel (%p182) target = $region16
        $region15: #{tpu_custom_call.1} parent=11 // pred_region
          %s186 = ssub.s32 2048, 2048
          %187 = vsyncadd [#allocation8], %s186
          %s188 = sshll.u32 [#allocation7], 4
          %s189 = int_to_ptr.vmem [resolvable:$true] %s188
          %194 = dma.hbm_to_vmem [thread:$0]  %s1, 2048, %s189, [#allocation8], 128, 128, 8
        $region16: #{tpu_custom_call.1} parent=11 // pred_fallthru
          _
        // Predicated region
        $region17: #{tpu_custom_call.1} parent=11 // pred_check
          %p195 = pneg %p99
        $region18: #{tpu_custom_call.1} parent=11 // pred_check_branch
          %197 = sbr.rel (%p195) target = $region20
        $region19: #{tpu_custom_call.1} parent=11 // pred_region
          %s199 = ssub.s32 2048, 2048
          %200 = vsyncadd [#allocation8], %s199
          %s201 = sshll.u32 [#allocation9], 4
          %s202 = int_to_ptr.vmem [resolvable:$true] %s201
          %207 = dma.hbm_to_vmem [thread:$0]  %s2, 2048, %s202, [#allocation8], 128, 128, 8
        $region20: #{tpu_custom_call.1} parent=11 // pred_fallthru
          _
        // Predicated region
        $region21: #{tpu_custom_call.1} parent=11 // pred_check
          %p208 = pneg %p120
        $region22: #{tpu_custom_call.1} parent=11 // pred_check_branch
          %210 = sbr.rel (%p208) target = $region24
        $region23: #{tpu_custom_call.1} parent=11 // pred_region
          %s212 = ssub.s32 2048, 2048
          %213 = vsyncadd [#allocation11], %s212
          %s214 = sshll.u32 [#allocation10], 4
          %s215 = int_to_ptr.vmem [resolvable:$true] %s214
          %220 = dma.hbm_to_vmem [thread:$0]  %s3, 2048, %s215, [#allocation11], 128, 128, 8
        $region24: #{tpu_custom_call.1} parent=11 // pred_fallthru
          _
        // Predicated region
        $region25: #{tpu_custom_call.1} parent=11 // pred_check
          %p221 = pneg %p141
        $region26: #{tpu_custom_call.1} parent=11 // pred_check_branch
          %223 = sbr.rel (%p221) target = $region28
        $region27: #{tpu_custom_call.1} parent=11 // pred_region
          %s225 = ssub.s32 2048, 2048
          %226 = vsyncadd [#allocation11], %s225
          %s227 = sshll.u32 [#allocation12], 4
          %s228 = int_to_ptr.vmem [resolvable:$true] %s227
          %233 = dma.hbm_to_vmem [thread:$0]  %s4, 2048, %s228, [#allocation11], 128, 128, 8
        $region28: #{tpu_custom_call.1} parent=11 // pred_fallthru
          _
      $region12: #{tpu_custom_call.1} parent=5 // pred_fallthru
        _
      %p234 = scmp.lt.s32.totalorder %s19, 4
      // Predicated region
      $region29: #{tpu_custom_call.1} parent=5 // pred_check
        %p235 = pneg %p234
      $region30: #{tpu_custom_call.1} parent=5 // pred_check_branch
        %237 = sbr.rel (%p235) target = $region32
      $region31: #{tpu_custom_call.1} parent=5 // pred_region
        // Predicated region
        $region33: #{tpu_custom_call.1} parent=31 // pred_check
          %p238 = pneg %p51
        $region34: #{tpu_custom_call.1} parent=31 // pred_check_branch
          %240 = sbr.rel (%p238) target = $region36
        $region35: #{tpu_custom_call.1} parent=31 // pred_region
          %s241 = sand.u32 %s41, 1
          %s242 = scalar_lea.sflag [#allocation5], %s241
          %s243 = sand.u32 %s41, 1
          %s244 = smul.addr %s243, 256
          %s245 = scalar_lea.vmem [#allocation4], %s244
          %s247 = ssub.s32 4096, 4096
          %248 = vsyncadd %s242, %s247
          %s249 = smul.addr %s26, 32
          %s250 = smul.addr %s249, 128
          %s251 = scalar_lea.hbm %s0, %s250
          %s252 = sshll.u32 %s245, 4
          %s253 = int_to_ptr.vmem [resolvable:$true] %s252
          %258 = dma.hbm_to_vmem [thread:$0]  %s251, 4096, %s253, %s242, 128, 128, 8
        $region36: #{tpu_custom_call.1} parent=31 // pred_fallthru
          _
      $region32: #{tpu_custom_call.1} parent=5 // pred_fallthru
        _
      %p259 = scmp.le.s32.totalorder 1, %s19
      %p260 = scmp.lt.s32.totalorder %s19, 5
      %p261 = pnand %p259, %p260
      %p262 = pneg %p261
      // Predicated region
      $region37: #{tpu_custom_call.1} parent=5 // pred_check
        _
      $region38: #{tpu_custom_call.1} parent=5 // pred_check_branch
        %264 = sbr.rel (%p261) target = $region40
      $region39: #{tpu_custom_call.1} parent=5 // pred_region
        %s265 = ssub.s32 %s19, 1
        %s266 = sand.u32 %s44, 1
        %s267 = scalar_lea.sflag [#allocation5], %s266
        %s268 = sand.u32 %s44, 1
        %s269 = smul.addr %s268, 256
        %s270 = scalar_lea.vmem [#allocation4], %s269
        // Predicated region
        $region41: #{tpu_custom_call.1} parent=39 // pred_check
          %p271 = pneg %p57
        $region42: #{tpu_custom_call.1} parent=39 // pred_check_branch
          %273 = sbr.rel (%p271) target = $region44
        $region43: #{tpu_custom_call.1} parent=39 // pred_region
          %274 = dma.done %s267, 4096
        $region44: #{tpu_custom_call.1} parent=39 // pred_fallthru
          _
        // Predicated region
        $region45: #{tpu_custom_call.1} parent=39 // pred_check
          %p275 = pneg %p78
        $region46: #{tpu_custom_call.1} parent=39 // pred_check_branch
          %277 = sbr.rel (%p275) target = $region48
        $region47: #{tpu_custom_call.1} parent=39 // pred_region
          %278 = dma.done [#allocation8], 2048
        $region48: #{tpu_custom_call.1} parent=39 // pred_fallthru
          _
        // Predicated region
        $region49: #{tpu_custom_call.1} parent=39 // pred_check
          %p279 = pneg %p99
        $region50: #{tpu_custom_call.1} parent=39 // pred_check_branch
          %281 = sbr.rel (%p279) target = $region52
        $region51: #{tpu_custom_call.1} parent=39 // pred_region
          %282 = dma.done [#allocation8], 2048
        $region52: #{tpu_custom_call.1} parent=39 // pred_fallthru
          _
        // Predicated region
        $region53: #{tpu_custom_call.1} parent=39 // pred_check
          %p283 = pneg %p120
        $region54: #{tpu_custom_call.1} parent=39 // pred_check_branch
          %285 = sbr.rel (%p283) target = $region56
        $region55: #{tpu_custom_call.1} parent=39 // pred_region
          %286 = dma.done [#allocation11], 2048
        $region56: #{tpu_custom_call.1} parent=39 // pred_fallthru
          _
        // Predicated region
        $region57: #{tpu_custom_call.1} parent=39 // pred_check
          %p287 = pneg %p141
        $region58: #{tpu_custom_call.1} parent=39 // pred_check_branch
          %289 = sbr.rel (%p287) target = $region60
        $region59: #{tpu_custom_call.1} parent=39 // pred_region
          %290 = dma.done [#allocation11], 2048
        $region60: #{tpu_custom_call.1} parent=39 // pred_fallthru
          _
        %s291 = sand.u32 %s44, 1
        %s292 = scalar_lea.sflag [#allocation5], %s291
        %s293 = sand.u32 %s44, 1
        %s294 = smul.addr %s293, 256
        %s295 = scalar_lea.vmem [#allocation4], %s294
        %p296 = pneg %p57
        %p297 = pneg %p54
        %p298 = pneg %p78
        %p299 = pneg %p75
        %p300 = pneg %p99
        %p301 = pneg %p96
        %p302 = pneg %p120
        %p303 = pneg %p117
        %p304 = pneg %p141
        %p305 = pneg %p138
        %p306 = pneg %p167
        %p307 = pneg %p164
        %s308 = sand.u32 %s154, 1
        %s309 = scalar_lea.sflag [#allocation6], %s308
        %s310 = sand.u32 %s154, 1
        %s311 = smul.addr %s310, 256
        %s312 = scalar_lea.vmem [#allocation13], %s311
        %p313 = scmp.eq.s32.totalorder %s29, 0
        // Predicated region
        $region61: #{tpu_custom_call.1} parent=39 // pred_check
          %p314 = pneg %p313
        $region62: #{tpu_custom_call.1} parent=39 // pred_check_branch
          %316 = sbr.rel (%p314) target = $region64
        $region63: #{tpu_custom_call.1} parent=39 // pred_region
          %v317 = vld [vmem:[%s270] sm:$0xff]
          %v318 = vld [vmem:[%s270 + $0x8] sm:$0xff]
          %v319 = vld [vmem:[%s270 + $0x10] sm:$0xff]
          %v320 = vld [vmem:[%s270 + $0x18] sm:$0xff]
          %v321 = vld [vmem:[%s270 + $0x20] sm:$0xff]
          %v322 = vld [vmem:[%s270 + $0x28] sm:$0xff]
          %v323 = vld [vmem:[%s270 + $0x30] sm:$0xff]
          %v324 = vld [vmem:[%s270 + $0x38] sm:$0xff]
          %v325 = vld [vmem:[%s270 + $0x40] sm:$0xff]
          %v326 = vld [vmem:[%s270 + $0x48] sm:$0xff]
          %v327 = vld [vmem:[%s270 + $0x50] sm:$0xff]
          %v328 = vld [vmem:[%s270 + $0x58] sm:$0xff]
          %v329 = vld [vmem:[%s270 + $0x60] sm:$0xff]
          %v330 = vld [vmem:[%s270 + $0x68] sm:$0xff]
          %v331 = vld [vmem:[%s270 + $0x70] sm:$0xff]
          %v332 = vld [vmem:[%s270 + $0x78] sm:$0xff]
          %v333 = vld [vmem:[%s270 + $0x80] sm:$0xff]
          %v334 = vld [vmem:[%s270 + $0x88] sm:$0xff]
          %v335 = vld [vmem:[%s270 + $0x90] sm:$0xff]
          %v336 = vld [vmem:[%s270 + $0x98] sm:$0xff]
          %v337 = vld [vmem:[%s270 + $0xa0] sm:$0xff]
          %v338 = vld [vmem:[%s270 + $0xa8] sm:$0xff]
          %v339 = vld [vmem:[%s270 + $0xb0] sm:$0xff]
          %v340 = vld [vmem:[%s270 + $0xb8] sm:$0xff]
          %v341 = vld [vmem:[%s270 + $0xc0] sm:$0xff]
          %v342 = vld [vmem:[%s270 + $0xc8] sm:$0xff]
          %v343 = vld [vmem:[%s270 + $0xd0] sm:$0xff]
          %v344 = vld [vmem:[%s270 + $0xd8] sm:$0xff]
          %v345 = vld [vmem:[%s270 + $0xe0] sm:$0xff]
          %v346 = vld [vmem:[%s270 + $0xe8] sm:$0xff]
          %v347 = vld [vmem:[%s270 + $0xf0] sm:$0xff]
          %v348 = vld [vmem:[%s270 + $0xf8] sm:$0xff]
          %v349 = vld [vmem:[#allocation9] sm:$0xff]
          %v350 = vld [vmem:[#allocation9 + $0x8] sm:$0xff]
          %v351 = vld [vmem:[#allocation9 + $0x10] sm:$0xff]
          %v352 = vld [vmem:[#allocation9 + $0x18] sm:$0xff]
          %v353 = vld [vmem:[#allocation9 + $0x20] sm:$0xff]
          %v354 = vld [vmem:[#allocation9 + $0x28] sm:$0xff]
          %v355 = vld [vmem:[#allocation9 + $0x30] sm:$0xff]
          %v356 = vld [vmem:[#allocation9 + $0x38] sm:$0xff]
          %v357 = vld [vmem:[#allocation9 + $0x40] sm:$0xff]
          %v358 = vld [vmem:[#allocation9 + $0x48] sm:$0xff]
          %v359 = vld [vmem:[#allocation9 + $0x50] sm:$0xff]
          %v360 = vld [vmem:[#allocation9 + $0x58] sm:$0xff]
          %v361 = vld [vmem:[#allocation9 + $0x60] sm:$0xff]
          %v362 = vld [vmem:[#allocation9 + $0x68] sm:$0xff]
          %v363 = vld [vmem:[#allocation9 + $0x70] sm:$0xff]
          %v364 = vld [vmem:[#allocation9 + $0x78] sm:$0xff]
          %365 = vmatprep.subr.mxu0 0.0
          %366 = vmatpush1.msra.mxu0 %v349
          %367 = vmatprep.subr.mxu0 0.0
          %368 = vmatpush1.msra.mxu0 %v350
          %369 = vmatprep.subr.mxu0 0.0
          %370 = vmatpush1.msra.mxu0 %v351
          %371 = vmatprep.subr.mxu0 0.0
          %372 = vmatpush1.msra.mxu0 %v352
          %373 = vmatprep.subr.mxu0 0.0
          %374 = vmatpush1.msra.mxu0 %v353
          %375 = vmatprep.subr.mxu0 0.0
          %376 = vmatpush1.msra.mxu0 %v354
          %377 = vmatprep.subr.mxu0 0.0
          %378 = vmatpush1.msra.mxu0 %v355
          %379 = vmatprep.subr.mxu0 0.0
          %380 = vmatpush1.msra.mxu0 %v356
          %381 = vmatprep.subr.mxu0 0.0
          %382 = vmatpush1.msra.mxu0 %v357
          %383 = vmatprep.subr.mxu0 0.0
          %384 = vmatpush1.msra.mxu0 %v358
          %385 = vmatprep.subr.mxu0 0.0
          %386 = vmatpush1.msra.mxu0 %v359
          %387 = vmatprep.subr.mxu0 0.0
          %388 = vmatpush1.msra.mxu0 %v360
          %389 = vmatprep.subr.mxu0 0.0
          %390 = vmatpush1.msra.mxu0 %v361
          %391 = vmatprep.subr.mxu0 0.0
          %392 = vmatpush1.msra.mxu0 %v362
          %393 = vmatprep.subr.mxu0 0.0
          %394 = vmatpush1.msra.mxu0 %v363
          %395 = vmatprep.subr.mxu0 0.0
          %396 = vmatpush1.msra.mxu0 %v364
          %397 = vmatprep.subr.mxu0 0.0
          %398 = vmatpush1.msra.mxu0 0.0
          %399 = vmatprep.subr.mxu0 0.0
          %400 = vmatpush1.msra.mxu0 0.0
          %401 = vmatprep.subr.mxu0 0.0
          %402 = vmatpush1.msra.mxu0 0.0
          %403 = vmatprep.subr.mxu0 0.0
          %404 = vmatpush1.msra.mxu0 0.0
          %405 = vmatprep.subr.mxu0 0.0
          %406 = vmatpush1.msra.mxu0 0.0
          %407 = vmatprep.subr.mxu0 0.0
          %408 = vmatpush1.msra.mxu0 0.0
          %409 = vmatprep.subr.mxu0 0.0
          %410 = vmatpush1.msra.mxu0 0.0
          %411 = vmatprep.subr.mxu0 0.0
          %412 = vmatpush1.msra.mxu0 0.0
          %413 = vmatprep.subr.mxu0 0.0
          %414 = vmatpush1.msra.mxu0 0.0
          %415 = vmatprep.subr.mxu0 0.0
          %416 = vmatpush1.msra.mxu0 0.0
          %417 = vmatprep.subr.mxu0 0.0
          %418 = vmatpush1.msra.mxu0 0.0
          %419 = vmatprep.subr.mxu0 0.0
          %420 = vmatpush1.msra.mxu0 0.0
          %421 = vmatprep.subr.mxu0 0.0
          %422 = vmatpush1.msra.mxu0 0.0
          %423 = vmatprep.subr.mxu0 0.0
          %424 = vmatpush1.msra.mxu0 0.0
          %425 = vmatprep.subr.mxu0 0.0
          %426 = vmatpush1.msra.mxu0 0.0
          %427 = vmatprep.subr.mxu0 0.0
          %428 = vmatpush1.msra.mxu0 0.0
          %429 = vmatprep.mubr.f32.mxu0 0.0
          %430 = vmatmul.mubr.f32.gmra.mrb[0].mxu0 %v317
          %v431 = vpop.f32.mrb[0].mxu0
          %v432 = vadd.f32 0.0, %v431
          %v433 = vpop.f32.mrb[0].mxu0
          %434 = vmatprep.mubr.f32.mxu0 0.0
          %435 = vmatmul.mubr.f32.gmra.mrb[0].mxu0 %v318
          %v436 = vpop.f32.mrb[0].mxu0
          %v437 = vadd.f32 0.0, %v436
          %v438 = vpop.f32.mrb[0].mxu0
          %439 = vmatprep.mubr.f32.mxu0 0.0
          %440 = vmatmul.mubr.f32.gmra.mrb[0].mxu0 %v319
          %v441 = vpop.f32.mrb[0].mxu0
          %v442 = vadd.f32 0.0, %v441
          %v443 = vpop.f32.mrb[0].mxu0
          %444 = vmatprep.mubr.f32.mxu0 0.0
          %445 = vmatmul.mubr.f32.gmra.mrb[0].mxu0 %v320
          %v446 = vpop.f32.mrb[0].mxu0
          %v447 = vadd.f32 0.0, %v446
          %v448 = vpop.f32.mrb[0].mxu0
          %449 = vmatprep.mubr.f32.mxu0 0.0
          %450 = vmatmul.mubr.f32.gmra.mrb[0].mxu0 %v321
          %v451 = vpop.f32.mrb[0].mxu0
          %v452 = vadd.f32 0.0, %v451
          %v453 = vpop.f32.mrb[0].mxu0
          %454 = vmatprep.mubr.f32.mxu0 0.0
          %455 = vmatmul.mubr.f32.gmra.mrb[0].mxu0 %v322
          %v456 = vpop.f32.mrb[0].mxu0
          %v457 = vadd.f32 0.0, %v456
          %v458 = vpop.f32.mrb[0].mxu0
          %459 = vmatprep.mubr.f32.mxu0 0.0
          %460 = vmatmul.mubr.f32.gmra.mrb[0].mxu0 %v323
          %v461 = vpop.f32.mrb[0].mxu0
          %v462 = vadd.f32 0.0, %v461
          %v463 = vpop.f32.mrb[0].mxu0
          %464 = vmatprep.mubr.f32.mxu0 0.0
          %465 = vmatmul.mubr.f32.gmra.mrb[0].mxu0 %v324
          %v466 = vpop.f32.mrb[0].mxu0
          %v467 = vadd.f32 0.0, %v466
          %v468 = vpop.f32.mrb[0].mxu0
          %469 = vmatprep.mubr.f32.mxu0 0.0
          %470 = vmatmul.mubr.f32.gmra.mrb[0].mxu0 %v325
          %v471 = vpop.f32.mrb[0].mxu0
          %v472 = vadd.f32 0.0, %v471
          %v473 = vpop.f32.mrb[0].mxu0
          %474 = vmatprep.mubr.f32.mxu0 0.0
          %475 = vmatmul.mubr.f32.gmra.mrb[0].mxu0 %v326
          %v476 = vpop.f32.mrb[0].mxu0
          %v477 = vadd.f32 0.0, %v476
          %v478 = vpop.f32.mrb[0].mxu0
          %479 = vmatprep.mubr.f32.mxu0 0.0
          %480 = vmatmul.mubr.f32.gmra.mrb[0].mxu0 %v327
          %v481 = vpop.f32.mrb[0].mxu0
          %v482 = vadd.f32 0.0, %v481
          %v483 = vpop.f32.mrb[0].mxu0
          %484 = vmatprep.mubr.f32.mxu0 0.0
          %485 = vmatmul.mubr.f32.gmra.mrb[0].mxu0 %v328
          %v486 = vpop.f32.mrb[0].mxu0
          %v487 = vadd.f32 0.0, %v486
          %v488 = vpop.f32.mrb[0].mxu0
          %489 = vmatprep.mubr.f32.mxu0 0.0
          %490 = vmatmul.mubr.f32.gmra.mrb[0].mxu0 %v329
          %v491 = vpop.f32.mrb[0].mxu0
          %v492 = vadd.f32 0.0, %v491
          %v493 = vpop.f32.mrb[0].mxu0
          %494 = vmatprep.mubr.f32.mxu0 0.0
          %495 = vmatmul.mubr.f32.gmra.mrb[0].mxu0 %v330
          %v496 = vpop.f32.mrb[0].mxu0
          %v497 = vadd.f32 0.0, %v496
          %v498 = vpop.f32.mrb[0].mxu0
          %499 = vmatprep.mubr.f32.mxu0 0.0
          %500 = vmatmul.mubr.f32.gmra.mrb[0].mxu0 %v331
          %v501 = vpop.f32.mrb[0].mxu0
          %v502 = vadd.f32 0.0, %v501
          %v503 = vpop.f32.mrb[0].mxu0
          %504 = vmatprep.mubr.f32.mxu0 0.0
          %505 = vmatmul.mubr.f32.gmra.mrb[0].mxu0 %v332
          %v506 = vpop.f32.mrb[0].mxu0
          %v507 = vadd.f32 0.0, %v506
          %v508 = vpop.f32.mrb[0].mxu0
          %509 = vmatprep.mubr.f32.mxu0 0.0
          %510 = vmatmul.mubr.f32.gmra.mrb[0].mxu0 %v333
          %v511 = vpop.f32.mrb[0].mxu0
          %v512 = vadd.f32 0.0, %v511
          %v513 = vpop.f32.mrb[0].mxu0
          %514 = vmatprep.mubr.f32.mxu0 0.0
          %515 = vmatmul.mubr.f32.gmra.mrb[0].mxu0 %v334
          %v516 = vpop.f32.mrb[0].mxu0
          %v517 = vadd.f32 0.0, %v516
          %v518 = vpop.f32.mrb[0].mxu0
          %519 = vmatprep.mubr.f32.mxu0 0.0
          %520 = vmatmul.mubr.f32.gmra.mrb[0].mxu0 %v335
          %v521 = vpop.f32.mrb[0].mxu0
          %v522 = vadd.f32 0.0, %v521
          %v523 = vpop.f32.mrb[0].mxu0
          %524 = vmatprep.mubr.f32.mxu0 0.0
          %525 = vmatmul.mubr.f32.gmra.mrb[0].mxu0 %v336
          %v526 = vpop.f32.mrb[0].mxu0
          %v527 = vadd.f32 0.0, %v526
          %v528 = vpop.f32.mrb[0].mxu0
          %529 = vmatprep.mubr.f32.mxu0 0.0
          %530 = vmatmul.mubr.f32.gmra.mrb[0].mxu0 %v337
          %v531 = vpop.f32.mrb[0].mxu0
          %v532 = vadd.f32 0.0, %v531
          %v533 = vpop.f32.mrb[0].mxu0
          %534 = vmatprep.mubr.f32.mxu0 0.0
          %535 = vmatmul.mubr.f32.gmra.mrb[0].mxu0 %v338
          %v536 = vpop.f32.mrb[0].mxu0
          %v537 = vadd.f32 0.0, %v536
          %v538 = vpop.f32.mrb[0].mxu0
          %539 = vmatprep.mubr.f32.mxu0 0.0
          %540 = vmatmul.mubr.f32.gmra.mrb[0].mxu0 %v339
          %v541 = vpop.f32.mrb[0].mxu0
          %v542 = vadd.f32 0.0, %v541
          %v543 = vpop.f32.mrb[0].mxu0
          %544 = vmatprep.mubr.f32.mxu0 0.0
          %545 = vmatmul.mubr.f32.gmra.mrb[0].mxu0 %v340
          %v546 = vpop.f32.mrb[0].mxu0
          %v547 = vadd.f32 0.0, %v546
          %v548 = vpop.f32.mrb[0].mxu0
          %549 = vmatprep.mubr.f32.mxu0 0.0
          %550 = vmatmul.mubr.f32.gmra.mrb[0].mxu0 %v341
          %v551 = vpop.f32.mrb[0].mxu0
          %v552 = vadd.f32 0.0, %v551
          %v553 = vpop.f32.mrb[0].mxu0
          %554 = vmatprep.mubr.f32.mxu0 0.0
          %555 = vmatmul.mubr.f32.gmra.mrb[0].mxu0 %v342
          %v556 = vpop.f32.mrb[0].mxu0
          %v557 = vadd.f32 0.0, %v556
          %v558 = vpop.f32.mrb[0].mxu0
          %559 = vmatprep.mubr.f32.mxu0 0.0
          %560 = vmatmul.mubr.f32.gmra.mrb[0].mxu0 %v343
          %v561 = vpop.f32.mrb[0].mxu0
          %v562 = vadd.f32 0.0, %v561
          %v563 = vpop.f32.mrb[0].mxu0
          %564 = vmatprep.mubr.f32.mxu0 0.0
          %565 = vmatmul.mubr.f32.gmra.mrb[0].mxu0 %v344
          %v566 = vpop.f32.mrb[0].mxu0
          %v567 = vadd.f32 0.0, %v566
          %v568 = vpop.f32.mrb[0].mxu0
          %569 = vmatprep.mubr.f32.mxu0 0.0
          %570 = vmatmul.mubr.f32.gmra.mrb[0].mxu0 %v345
          %v571 = vpop.f32.mrb[0].mxu0
          %v572 = vadd.f32 0.0, %v571
          %v573 = vpop.f32.mrb[0].mxu0
          %574 = vmatprep.mubr.f32.mxu0 0.0
          %575 = vmatmul.mubr.f32.gmra.mrb[0].mxu0 %v346
          %v576 = vpop.f32.mrb[0].mxu0
          %v577 = vadd.f32 0.0, %v576
          %v578 = vpop.f32.mrb[0].mxu0
          %579 = vmatprep.mubr.f32.mxu0 0.0
          %580 = vmatmul.mubr.f32.gmra.mrb[0].mxu0 %v347
          %v581 = vpop.f32.mrb[0].mxu0
          %v582 = vadd.f32 0.0, %v581
          %v583 = vpop.f32.mrb[0].mxu0
          %584 = vmatprep.mubr.f32.mxu0 0.0
          %585 = vmatmul.mubr.f32.gmra.mrb[0].mxu0 %v348
          %v586 = vpop.f32.mrb[0].mxu0
          %v587 = vadd.f32 0.0, %v586
          %v588 = vpop.f32.mrb[0].mxu0
          %589 = vdwg.mxu0
          %590 = vst [vmem:[#allocation2] sm:$0xff] %v432
          %591 = vst [vmem:[#allocation2 + $0x8] sm:$0xff] %v437
          %592 = vst [vmem:[#allocation2 + $0x10] sm:$0xff] %v442
          %593 = vst [vmem:[#allocation2 + $0x18] sm:$0xff] %v447
          %594 = vst [vmem:[#allocation2 + $0x20] sm:$0xff] %v452
          %595 = vst [vmem:[#allocation2 + $0x28] sm:$0xff] %v457
          %596 = vst [vmem:[#allocation2 + $0x30] sm:$0xff] %v462
          %597 = vst [vmem:[#allocation2 + $0x38] sm:$0xff] %v467
          %598 = vst [vmem:[#allocation2 + $0x40] sm:$0xff] %v472
          %599 = vst [vmem:[#allocation2 + $0x48] sm:$0xff] %v477
          %600 = vst [vmem:[#allocation2 + $0x50] sm:$0xff] %v482
          %601 = vst [vmem:[#allocation2 + $0x58] sm:$0xff] %v487
          %602 = vst [vmem:[#allocation2 + $0x60] sm:$0xff] %v492
          %603 = vst [vmem:[#allocation2 + $0x68] sm:$0xff] %v497
          %604 = vst [vmem:[#allocation2 + $0x70] sm:$0xff] %v502
          %605 = vst [vmem:[#allocation2 + $0x78] sm:$0xff] %v507
          %606 = vst [vmem:[#allocation2 + $0x80] sm:$0xff] %v512
          %607 = vst [vmem:[#allocation2 + $0x88] sm:$0xff] %v517
          %608 = vst [vmem:[#allocation2 + $0x90] sm:$0xff] %v522
          %609 = vst [vmem:[#allocation2 + $0x98] sm:$0xff] %v527
          %610 = vst [vmem:[#allocation2 + $0xa0] sm:$0xff] %v532
          %611 = vst [vmem:[#allocation2 + $0xa8] sm:$0xff] %v537
          %612 = vst [vmem:[#allocation2 + $0xb0] sm:$0xff] %v542
          %613 = vst [vmem:[#allocation2 + $0xb8] sm:$0xff] %v547
          %614 = vst [vmem:[#allocation2 + $0xc0] sm:$0xff] %v552
          %615 = vst [vmem:[#allocation2 + $0xc8] sm:$0xff] %v557
          %616 = vst [vmem:[#allocation2 + $0xd0] sm:$0xff] %v562
          %617 = vst [vmem:[#allocation2 + $0xd8] sm:$0xff] %v567
          %618 = vst [vmem:[#allocation2 + $0xe0] sm:$0xff] %v572
          %619 = vst [vmem:[#allocation2 + $0xe8] sm:$0xff] %v577
          %620 = vst [vmem:[#allocation2 + $0xf0] sm:$0xff] %v582
          %621 = vst [vmem:[#allocation2 + $0xf8] sm:$0xff] %v587
        $region64: #{tpu_custom_call.1} parent=39 // pred_fallthru
          _
        %s622 = smul.u32 %s29, 128
        %s623 = scalar_lea.vmem %s270, %s622 [#allocation4]
        %v624 = vld [vmem:[%s623] sm:$0xff]
        %v625 = vld [vmem:[%s623 + $0x8] sm:$0xff]
        %v626 = vld [vmem:[%s623 + $0x10] sm:$0xff]
        %v627 = vld [vmem:[%s623 + $0x18] sm:$0xff]
        %v628 = vld [vmem:[%s623 + $0x20] sm:$0xff]
        %v629 = vld [vmem:[%s623 + $0x28] sm:$0xff]
        %v630 = vld [vmem:[%s623 + $0x30] sm:$0xff]
        %v631 = vld [vmem:[%s623 + $0x38] sm:$0xff]
        %v632 = vld [vmem:[%s623 + $0x40] sm:$0xff]
        %v633 = vld [vmem:[%s623 + $0x48] sm:$0xff]
        %v634 = vld [vmem:[%s623 + $0x50] sm:$0xff]
        %v635 = vld [vmem:[%s623 + $0x58] sm:$0xff]
        %v636 = vld [vmem:[%s623 + $0x60] sm:$0xff]
        %v637 = vld [vmem:[%s623 + $0x68] sm:$0xff]
        %v638 = vld [vmem:[%s623 + $0x70] sm:$0xff]
        %v639 = vld [vmem:[%s623 + $0x78] sm:$0xff]
        %v640 = vld [vmem:[#allocation7] sm:$0xff]
        %v641 = vld [vmem:[#allocation7 + $0x8] sm:$0xff]
        %v642 = vld [vmem:[#allocation7 + $0x10] sm:$0xff]
        %v643 = vld [vmem:[#allocation7 + $0x18] sm:$0xff]
        %v644 = vld [vmem:[#allocation7 + $0x20] sm:$0xff]
        %v645 = vld [vmem:[#allocation7 + $0x28] sm:$0xff]
        %v646 = vld [vmem:[#allocation7 + $0x30] sm:$0xff]
        %v647 = vld [vmem:[#allocation7 + $0x38] sm:$0xff]
        %v648 = vld [vmem:[#allocation7 + $0x40] sm:$0xff]
        %v649 = vld [vmem:[#allocation7 + $0x48] sm:$0xff]
        %v650 = vld [vmem:[#allocation7 + $0x50] sm:$0xff]
        %v651 = vld [vmem:[#allocation7 + $0x58] sm:$0xff]
        %v652 = vld [vmem:[#allocation7 + $0x60] sm:$0xff]
        %v653 = vld [vmem:[#allocation7 + $0x68] sm:$0xff]
        %v654 = vld [vmem:[#allocation7 + $0x70] sm:$0xff]
        %v655 = vld [vmem:[#allocation7 + $0x78] sm:$0xff]
        %656 = vmatprep.subr.mxu0 0.0
        %657 = vmatpush1.xpose.msra.mxu0 %v624
        %658 = vmatprep.subr.mxu0 0.0
        %659 = vmatpush1.xpose.msra.mxu0 %v625
        %660 = vmatprep.subr.mxu0 0.0
        %661 = vmatpush1.xpose.msra.mxu0 %v626
        %662 = vmatprep.subr.mxu0 0.0
        %663 = vmatpush1.xpose.msra.mxu0 %v627
        %664 = vmatprep.subr.mxu0 0.0
        %665 = vmatpush1.xpose.msra.mxu0 %v628
        %666 = vmatprep.subr.mxu0 0.0
        %667 = vmatpush1.xpose.msra.mxu0 %v629
        %668 = vmatprep.subr.mxu0 0.0
        %669 = vmatpush1.xpose.msra.mxu0 %v630
        %670 = vmatprep.subr.mxu0 0.0
        %671 = vmatpush1.xpose.msra.mxu0 %v631
        %672 = vmatprep.subr.mxu0 0.0
        %673 = vmatpush1.xpose.msra.mxu0 %v632
        %674 = vmatprep.subr.mxu0 0.0
        %675 = vmatpush1.xpose.msra.mxu0 %v633
        %676 = vmatprep.subr.mxu0 0.0
        %677 = vmatpush1.xpose.msra.mxu0 %v634
        %678 = vmatprep.subr.mxu0 0.0
        %679 = vmatpush1.xpose.msra.mxu0 %v635
        %680 = vmatprep.subr.mxu0 0.0
        %681 = vmatpush1.xpose.msra.mxu0 %v636
        %682 = vmatprep.subr.mxu0 0.0
        %683 = vmatpush1.xpose.msra.mxu0 %v637
        %684 = vmatprep.subr.mxu0 0.0
        %685 = vmatpush1.xpose.msra.mxu0 %v638
        %686 = vmatprep.subr.mxu0 0.0
        %687 = vmatpush1.xpose.msra.mxu0 %v639
        %688 = vmatprep.subr.mxu0 0.0
        %689 = vmatpush1.xpose.msra.mxu0 0.0
        %690 = vmatprep.subr.mxu0 0.0
        %691 = vmatpush1.xpose.msra.mxu0 0.0
        %692 = vmatprep.subr.mxu0 0.0
        %693 = vmatpush1.xpose.msra.mxu0 0.0
        %694 = vmatprep.subr.mxu0 0.0
        %695 = vmatpush1.xpose.msra.mxu0 0.0
        %696 = vmatprep.subr.mxu0 0.0
        %697 = vmatpush1.xpose.msra.mxu0 0.0
        %698 = vmatprep.subr.mxu0 0.0
        %699 = vmatpush1.xpose.msra.mxu0 0.0
        %700 = vmatprep.subr.mxu0 0.0
        %701 = vmatpush1.xpose.msra.mxu0 0.0
        %702 = vmatprep.subr.mxu0 0.0
        %703 = vmatpush1.xpose.msra.mxu0 0.0
        %704 = vmatprep.subr.mxu0 0.0
        %705 = vmatpush1.xpose.msra.mxu0 0.0
        %706 = vmatprep.subr.mxu0 0.0
        %707 = vmatpush1.xpose.msra.mxu0 0.0
        %708 = vmatprep.subr.mxu0 0.0
        %709 = vmatpush1.xpose.msra.mxu0 0.0
        %710 = vmatprep.subr.mxu0 0.0
        %711 = vmatpush1.xpose.msra.mxu0 0.0
        %712 = vmatprep.subr.mxu0 0.0
        %713 = vmatpush1.xpose.msra.mxu0 0.0
        %714 = vmatprep.subr.mxu0 0.0
        %715 = vmatpush1.xpose.msra.mxu0 0.0
        %716 = vmatprep.subr.mxu0 0.0
        %717 = vmatpush1.xpose.msra.mxu0 0.0
        %718 = vmatprep.subr.mxu0 0.0
        %719 = vmatpush1.xpose.msra.mxu0 0.0
        %720 = vmatprep.mubr.f32.mxu0 0.0
        %721 = vmatmul.mubr.f32.gmra.mrb[0].mxu0 %v640
        %v722 = vpop.f32.mrb[0].mxu0
        %v723 = vadd.f32 0.0, %v722
        %v724 = vpop.f32.mrb[0].mxu0
        %725 = vmatprep.mubr.f32.mxu0 0.0
        %726 = vmatmul.mubr.f32.gmra.mrb[0].mxu0 %v641
        %v727 = vpop.f32.mrb[0].mxu0
        %v728 = vadd.f32 0.0, %v727
        %v729 = vpop.f32.mrb[0].mxu0
        %730 = vmatprep.mubr.f32.mxu0 0.0
        %731 = vmatmul.mubr.f32.gmra.mrb[0].mxu0 %v642
        %v732 = vpop.f32.mrb[0].mxu0
        %v733 = vadd.f32 0.0, %v732
        %v734 = vpop.f32.mrb[0].mxu0
        %735 = vmatprep.mubr.f32.mxu0 0.0
        %736 = vmatmul.mubr.f32.gmra.mrb[0].mxu0 %v643
        %v737 = vpop.f32.mrb[0].mxu0
        %v738 = vadd.f32 0.0, %v737
        %v739 = vpop.f32.mrb[0].mxu0
        %740 = vmatprep.mubr.f32.mxu0 0.0
        %741 = vmatmul.mubr.f32.gmra.mrb[0].mxu0 %v644
        %v742 = vpop.f32.mrb[0].mxu0
        %v743 = vadd.f32 0.0, %v742
        %v744 = vpop.f32.mrb[0].mxu0
        %745 = vmatprep.mubr.f32.mxu0 0.0
        %746 = vmatmul.mubr.f32.gmra.mrb[0].mxu0 %v645
        %v747 = vpop.f32.mrb[0].mxu0
        %v748 = vadd.f32 0.0, %v747
        %v749 = vpop.f32.mrb[0].mxu0
        %750 = vmatprep.mubr.f32.mxu0 0.0
        %751 = vmatmul.mubr.f32.gmra.mrb[0].mxu0 %v646
        %v752 = vpop.f32.mrb[0].mxu0
        %v753 = vadd.f32 0.0, %v752
        %v754 = vpop.f32.mrb[0].mxu0
        %755 = vmatprep.mubr.f32.mxu0 0.0
        %756 = vmatmul.mubr.f32.gmra.mrb[0].mxu0 %v647
        %v757 = vpop.f32.mrb[0].mxu0
        %v758 = vadd.f32 0.0, %v757
        %v759 = vpop.f32.mrb[0].mxu0
        %760 = vmatprep.mubr.f32.mxu0 0.0
        %761 = vmatmul.mubr.f32.gmra.mrb[0].mxu0 %v648
        %v762 = vpop.f32.mrb[0].mxu0
        %v763 = vadd.f32 0.0, %v762
        %v764 = vpop.f32.mrb[0].mxu0
        %765 = vmatprep.mubr.f32.mxu0 0.0
        %766 = vmatmul.mubr.f32.gmra.mrb[0].mxu0 %v649
        %v767 = vpop.f32.mrb[0].mxu0
        %v768 = vadd.f32 0.0, %v767
        %v769 = vpop.f32.mrb[0].mxu0
        %770 = vmatprep.mubr.f32.mxu0 0.0
        %771 = vmatmul.mubr.f32.gmra.mrb[0].mxu0 %v650
        %v772 = vpop.f32.mrb[0].mxu0
        %v773 = vadd.f32 0.0, %v772
        %v774 = vpop.f32.mrb[0].mxu0
        %775 = vmatprep.mubr.f32.mxu0 0.0
        %776 = vmatmul.mubr.f32.gmra.mrb[0].mxu0 %v651
        %v777 = vpop.f32.mrb[0].mxu0
        %v778 = vadd.f32 0.0, %v777
        %v779 = vpop.f32.mrb[0].mxu0
        %780 = vmatprep.mubr.f32.mxu0 0.0
        %781 = vmatmul.mubr.f32.gmra.mrb[0].mxu0 %v652
        %v782 = vpop.f32.mrb[0].mxu0
        %v783 = vadd.f32 0.0, %v782
        %v784 = vpop.f32.mrb[0].mxu0
        %785 = vmatprep.mubr.f32.mxu0 0.0
        %786 = vmatmul.mubr.f32.gmra.mrb[0].mxu0 %v653
        %v787 = vpop.f32.mrb[0].mxu0
        %v788 = vadd.f32 0.0, %v787
        %v789 = vpop.f32.mrb[0].mxu0
        %790 = vmatprep.mubr.f32.mxu0 0.0
        %791 = vmatmul.mubr.f32.gmra.mrb[0].mxu0 %v654
        %v792 = vpop.f32.mrb[0].mxu0
        %v793 = vadd.f32 0.0, %v792
        %v794 = vpop.f32.mrb[0].mxu0
        %795 = vmatprep.mubr.f32.mxu0 0.0
        %796 = vmatmul.mubr.f32.gmra.mrb[0].mxu0 %v655
        %v797 = vpop.f32.mrb[0].mxu0
        %v798 = vadd.f32 0.0, %v797
        %v799 = vpop.f32.mrb[0].mxu0
        %800 = vdwg.mxu0
        %v801 = vld [vmem:[#allocation10] sm:$0xff]
        %v802 = vld [vmem:[#allocation10 + $0x8] sm:$0xff]
        %v803 = vld [vmem:[#allocation10 + $0x10] sm:$0xff]
        %v804 = vld [vmem:[#allocation10 + $0x18] sm:$0xff]
        %v805 = vld [vmem:[#allocation10 + $0x20] sm:$0xff]
        %v806 = vld [vmem:[#allocation10 + $0x28] sm:$0xff]
        %v807 = vld [vmem:[#allocation10 + $0x30] sm:$0xff]
        %v808 = vld [vmem:[#allocation10 + $0x38] sm:$0xff]
        %v809 = vld [vmem:[#allocation10 + $0x40] sm:$0xff]
        %v810 = vld [vmem:[#allocation10 + $0x48] sm:$0xff]
        %v811 = vld [vmem:[#allocation10 + $0x50] sm:$0xff]
        %v812 = vld [vmem:[#allocation10 + $0x58] sm:$0xff]
        %v813 = vld [vmem:[#allocation10 + $0x60] sm:$0xff]
        %v814 = vld [vmem:[#allocation10 + $0x68] sm:$0xff]
        %v815 = vld [vmem:[#allocation10 + $0x70] sm:$0xff]
        %v816 = vld [vmem:[#allocation10 + $0x78] sm:$0xff]
        %817 = vmatprep.subr.mxu0 0.0
        %818 = vmatpush1.xpose.msra.mxu0 %v624
        %819 = vmatprep.subr.mxu0 0.0
        %820 = vmatpush1.xpose.msra.mxu0 %v625
        %821 = vmatprep.subr.mxu0 0.0
        %822 = vmatpush1.xpose.msra.mxu0 %v626
        %823 = vmatprep.subr.mxu0 0.0
        %824 = vmatpush1.xpose.msra.mxu0 %v627
        %825 = vmatprep.subr.mxu0 0.0
        %826 = vmatpush1.xpose.msra.mxu0 %v628
        %827 = vmatprep.subr.mxu0 0.0
        %828 = vmatpush1.xpose.msra.mxu0 %v629
        %829 = vmatprep.subr.mxu0 0.0
        %830 = vmatpush1.xpose.msra.mxu0 %v630
        %831 = vmatprep.subr.mxu0 0.0
        %832 = vmatpush1.xpose.msra.mxu0 %v631
        %833 = vmatprep.subr.mxu0 0.0
        %834 = vmatpush1.xpose.msra.mxu0 %v632
        %835 = vmatprep.subr.mxu0 0.0
        %836 = vmatpush1.xpose.msra.mxu0 %v633
        %837 = vmatprep.subr.mxu0 0.0
        %838 = vmatpush1.xpose.msra.mxu0 %v634
        %839 = vmatprep.subr.mxu0 0.0
        %840 = vmatpush1.xpose.msra.mxu0 %v635
        %841 = vmatprep.subr.mxu0 0.0
        %842 = vmatpush1.xpose.msra.mxu0 %v636
        %843 = vmatprep.subr.mxu0 0.0
        %844 = vmatpush1.xpose.msra.mxu0 %v637
        %845 = vmatprep.subr.mxu0 0.0
        %846 = vmatpush1.xpose.msra.mxu0 %v638
        %847 = vmatprep.subr.mxu0 0.0
        %848 = vmatpush1.xpose.msra.mxu0 %v639
        %849 = vmatprep.subr.mxu0 0.0
        %850 = vmatpush1.xpose.msra.mxu0 0.0
        %851 = vmatprep.subr.mxu0 0.0
        %852 = vmatpush1.xpose.msra.mxu0 0.0
        %853 = vmatprep.subr.mxu0 0.0
        %854 = vmatpush1.xpose.msra.mxu0 0.0
        %855 = vmatprep.subr.mxu0 0.0
        %856 = vmatpush1.xpose.msra.mxu0 0.0
        %857 = vmatprep.subr.mxu0 0.0
        %858 = vmatpush1.xpose.msra.mxu0 0.0
        %859 = vmatprep.subr.mxu0 0.0
        %860 = vmatpush1.xpose.msra.mxu0 0.0
        %861 = vmatprep.subr.mxu0 0.0
        %862 = vmatpush1.xpose.msra.mxu0 0.0
        %863 = vmatprep.subr.mxu0 0.0
        %864 = vmatpush1.xpose.msra.mxu0 0.0
        %865 = vmatprep.subr.mxu0 0.0
        %866 = vmatpush1.xpose.msra.mxu0 0.0
        %867 = vmatprep.subr.mxu0 0.0
        %868 = vmatpush1.xpose.msra.mxu0 0.0
        %869 = vmatprep.subr.mxu0 0.0
        %870 = vmatpush1.xpose.msra.mxu0 0.0
        %871 = vmatprep.subr.mxu0 0.0
        %872 = vmatpush1.xpose.msra.mxu0 0.0
        %873 = vmatprep.subr.mxu0 0.0
        %874 = vmatpush1.xpose.msra.mxu0 0.0
        %875 = vmatprep.subr.mxu0 0.0
        %876 = vmatpush1.xpose.msra.mxu0 0.0
        %877 = vmatprep.subr.mxu0 0.0
        %878 = vmatpush1.xpose.msra.mxu0 0.0
        %879 = vmatprep.subr.mxu0 0.0
        %880 = vmatpush1.xpose.msra.mxu0 0.0
        %881 = vmatprep.mubr.f32.mxu0 0.0
        %882 = vmatmul.mubr.f32.gmra.mrb[0].mxu0 %v801
        %v883 = vpop.f32.mrb[0].mxu0
        %v884 = vadd.f32 0.0, %v883
        %v885 = vpop.f32.mrb[0].mxu0
        %886 = vmatprep.mubr.f32.mxu0 0.0
        %887 = vmatmul.mubr.f32.gmra.mrb[0].mxu0 %v802
        %v888 = vpop.f32.mrb[0].mxu0
        %v889 = vadd.f32 0.0, %v888
        %v890 = vpop.f32.mrb[0].mxu0
        %891 = vmatprep.mubr.f32.mxu0 0.0
        %892 = vmatmul.mubr.f32.gmra.mrb[0].mxu0 %v803
        %v893 = vpop.f32.mrb[0].mxu0
        %v894 = vadd.f32 0.0, %v893
        %v895 = vpop.f32.mrb[0].mxu0
        %896 = vmatprep.mubr.f32.mxu0 0.0
        %897 = vmatmul.mubr.f32.gmra.mrb[0].mxu0 %v804
        %v898 = vpop.f32.mrb[0].mxu0
        %v899 = vadd.f32 0.0, %v898
        %v900 = vpop.f32.mrb[0].mxu0
        %901 = vmatprep.mubr.f32.mxu0 0.0
        %902 = vmatmul.mubr.f32.gmra.mrb[0].mxu0 %v805
        %v903 = vpop.f32.mrb[0].mxu0
        %v904 = vadd.f32 0.0, %v903
        %v905 = vpop.f32.mrb[0].mxu0
        %906 = vmatprep.mubr.f32.mxu0 0.0
        %907 = vmatmul.mubr.f32.gmra.mrb[0].mxu0 %v806
        %v908 = vpop.f32.mrb[0].mxu0
        %v909 = vadd.f32 0.0, %v908
        %v910 = vpop.f32.mrb[0].mxu0
        %911 = vmatprep.mubr.f32.mxu0 0.0
        %912 = vmatmul.mubr.f32.gmra.mrb[0].mxu0 %v807
        %v913 = vpop.f32.mrb[0].mxu0
        %v914 = vadd.f32 0.0, %v913
        %v915 = vpop.f32.mrb[0].mxu0
        %916 = vmatprep.mubr.f32.mxu0 0.0
        %917 = vmatmul.mubr.f32.gmra.mrb[0].mxu0 %v808
        %v918 = vpop.f32.mrb[0].mxu0
        %v919 = vadd.f32 0.0, %v918
        %v920 = vpop.f32.mrb[0].mxu0
        %921 = vmatprep.mubr.f32.mxu0 0.0
        %922 = vmatmul.mubr.f32.gmra.mrb[0].mxu0 %v809
        %v923 = vpop.f32.mrb[0].mxu0
        %v924 = vadd.f32 0.0, %v923
        %v925 = vpop.f32.mrb[0].mxu0
        %926 = vmatprep.mubr.f32.mxu0 0.0
        %927 = vmatmul.mubr.f32.gmra.mrb[0].mxu0 %v810
        %v928 = vpop.f32.mrb[0].mxu0
        %v929 = vadd.f32 0.0, %v928
        %v930 = vpop.f32.mrb[0].mxu0
        %931 = vmatprep.mubr.f32.mxu0 0.0
        %932 = vmatmul.mubr.f32.gmra.mrb[0].mxu0 %v811
        %v933 = vpop.f32.mrb[0].mxu0
        %v934 = vadd.f32 0.0, %v933
        %v935 = vpop.f32.mrb[0].mxu0
        %936 = vmatprep.mubr.f32.mxu0 0.0
        %937 = vmatmul.mubr.f32.gmra.mrb[0].mxu0 %v812
        %v938 = vpop.f32.mrb[0].mxu0
        %v939 = vadd.f32 0.0, %v938
        %v940 = vpop.f32.mrb[0].mxu0
        %941 = vmatprep.mubr.f32.mxu0 0.0
        %942 = vmatmul.mubr.f32.gmra.mrb[0].mxu0 %v813
        %v943 = vpop.f32.mrb[0].mxu0
        %v944 = vadd.f32 0.0, %v943
        %v945 = vpop.f32.mrb[0].mxu0
        %946 = vmatprep.mubr.f32.mxu0 0.0
        %947 = vmatmul.mubr.f32.gmra.mrb[0].mxu0 %v814
        %v948 = vpop.f32.mrb[0].mxu0
        %v949 = vadd.f32 0.0, %v948
        %v950 = vpop.f32.mrb[0].mxu0
        %951 = vmatprep.mubr.f32.mxu0 0.0
        %952 = vmatmul.mubr.f32.gmra.mrb[0].mxu0 %v815
        %v953 = vpop.f32.mrb[0].mxu0
        %v954 = vadd.f32 0.0, %v953
        %v955 = vpop.f32.mrb[0].mxu0
        %956 = vmatprep.mubr.f32.mxu0 0.0
        %957 = vmatmul.mubr.f32.gmra.mrb[0].mxu0 %v816
        %v958 = vpop.f32.mrb[0].mxu0
        %v959 = vadd.f32 0.0, %v958
        %v960 = vpop.f32.mrb[0].mxu0
        %961 = vdwg.mxu0
        %v962 = vld [vmem:[#allocation2] sm:$0xff]
        %v963 = vld [vmem:[#allocation2 + $0x8] sm:$0xff]
        %v964 = vld [vmem:[#allocation2 + $0x10] sm:$0xff]
        %v965 = vld [vmem:[#allocation2 + $0x18] sm:$0xff]
        %v966 = vld [vmem:[#allocation2 + $0x20] sm:$0xff]
        %v967 = vld [vmem:[#allocation2 + $0x28] sm:$0xff]
        %v968 = vld [vmem:[#allocation2 + $0x30] sm:$0xff]
        %v969 = vld [vmem:[#allocation2 + $0x38] sm:$0xff]
        %v970 = vld [vmem:[#allocation2 + $0x40] sm:$0xff]
        %v971 = vld [vmem:[#allocation2 + $0x48] sm:$0xff]
        %v972 = vld [vmem:[#allocation2 + $0x50] sm:$0xff]
        %v973 = vld [vmem:[#allocation2 + $0x58] sm:$0xff]
        %v974 = vld [vmem:[#allocation2 + $0x60] sm:$0xff]
        %v975 = vld [vmem:[#allocation2 + $0x68] sm:$0xff]
        %v976 = vld [vmem:[#allocation2 + $0x70] sm:$0xff]
        %v977 = vld [vmem:[#allocation2 + $0x78] sm:$0xff]
        %v978 = vld [vmem:[#allocation2 + $0x80] sm:$0xff]
        %v979 = vld [vmem:[#allocation2 + $0x88] sm:$0xff]
        %v980 = vld [vmem:[#allocation2 + $0x90] sm:$0xff]
        %v981 = vld [vmem:[#allocation2 + $0x98] sm:$0xff]
        %v982 = vld [vmem:[#allocation2 + $0xa0] sm:$0xff]
        %v983 = vld [vmem:[#allocation2 + $0xa8] sm:$0xff]
        %v984 = vld [vmem:[#allocation2 + $0xb0] sm:$0xff]
        %v985 = vld [vmem:[#allocation2 + $0xb8] sm:$0xff]
        %v986 = vld [vmem:[#allocation2 + $0xc0] sm:$0xff]
        %v987 = vld [vmem:[#allocation2 + $0xc8] sm:$0xff]
        %v988 = vld [vmem:[#allocation2 + $0xd0] sm:$0xff]
        %v989 = vld [vmem:[#allocation2 + $0xd8] sm:$0xff]
        %v990 = vld [vmem:[#allocation2 + $0xe0] sm:$0xff]
        %v991 = vld [vmem:[#allocation2 + $0xe8] sm:$0xff]
        %v992 = vld [vmem:[#allocation2 + $0xf0] sm:$0xff]
        %v993 = vld [vmem:[#allocation2 + $0xf8] sm:$0xff]
        %994 = vmatprep.subr.mxu0 0.0
        %995 = vmatpush1.msra.mxu0 %v723
        %996 = vmatprep.subr.mxu0 0.0
        %997 = vmatpush1.msra.mxu0 %v728
        %998 = vmatprep.subr.mxu0 0.0
        %999 = vmatpush1.msra.mxu0 %v733
        %1000 = vmatprep.subr.mxu0 0.0
        %1001 = vmatpush1.msra.mxu0 %v738
        %1002 = vmatprep.subr.mxu0 0.0
        %1003 = vmatpush1.msra.mxu0 %v743
        %1004 = vmatprep.subr.mxu0 0.0
        %1005 = vmatpush1.msra.mxu0 %v748
        %1006 = vmatprep.subr.mxu0 0.0
        %1007 = vmatpush1.msra.mxu0 %v753
        %1008 = vmatprep.subr.mxu0 0.0
        %1009 = vmatpush1.msra.mxu0 %v758
        %1010 = vmatprep.subr.mxu0 0.0
        %1011 = vmatpush1.msra.mxu0 %v763
        %1012 = vmatprep.subr.mxu0 0.0
        %1013 = vmatpush1.msra.mxu0 %v768
        %1014 = vmatprep.subr.mxu0 0.0
        %1015 = vmatpush1.msra.mxu0 %v773
        %1016 = vmatprep.subr.mxu0 0.0
        %1017 = vmatpush1.msra.mxu0 %v778
        %1018 = vmatprep.subr.mxu0 0.0
        %1019 = vmatpush1.msra.mxu0 %v783
        %1020 = vmatprep.subr.mxu0 0.0
        %1021 = vmatpush1.msra.mxu0 %v788
        %1022 = vmatprep.subr.mxu0 0.0
        %1023 = vmatpush1.msra.mxu0 %v793
        %1024 = vmatprep.subr.mxu0 0.0
        %1025 = vmatpush1.msra.mxu0 %v798
        %1026 = vmatprep.subr.mxu0 0.0
        %1027 = vmatpush1.msra.mxu0 0.0
        %1028 = vmatprep.subr.mxu0 0.0
        %1029 = vmatpush1.msra.mxu0 0.0
        %1030 = vmatprep.subr.mxu0 0.0
        %1031 = vmatpush1.msra.mxu0 0.0
        %1032 = vmatprep.subr.mxu0 0.0
        %1033 = vmatpush1.msra.mxu0 0.0
        %1034 = vmatprep.subr.mxu0 0.0
        %1035 = vmatpush1.msra.mxu0 0.0
        %1036 = vmatprep.subr.mxu0 0.0
        %1037 = vmatpush1.msra.mxu0 0.0
        %1038 = vmatprep.subr.mxu0 0.0
        %1039 = vmatpush1.msra.mxu0 0.0
        %1040 = vmatprep.subr.mxu0 0.0
        %1041 = vmatpush1.msra.mxu0 0.0
        %1042 = vmatprep.subr.mxu0 0.0
        %1043 = vmatpush1.msra.mxu0 0.0
        %1044 = vmatprep.subr.mxu0 0.0
        %1045 = vmatpush1.msra.mxu0 0.0
        %1046 = vmatprep.subr.mxu0 0.0
        %1047 = vmatpush1.msra.mxu0 0.0
        %1048 = vmatprep.subr.mxu0 0.0
        %1049 = vmatpush1.msra.mxu0 0.0
        %1050 = vmatprep.subr.mxu0 0.0
        %1051 = vmatpush1.msra.mxu0 0.0
        %1052 = vmatprep.subr.mxu0 0.0
        %1053 = vmatpush1.msra.mxu0 0.0
        %1054 = vmatprep.subr.mxu0 0.0
        %1055 = vmatpush1.msra.mxu0 0.0
        %1056 = vmatprep.subr.mxu0 0.0
        %1057 = vmatpush1.msra.mxu0 0.0
        %1058 = vmatprep.mubr.f32.mxu0 0.0
        %1059 = vmatmul.mubr.f32.gmra.mrb[0].mxu0 %v962
        %v1060 = vpop.f32.mrb[0].mxu0
        %v1061 = vadd.f32 0.0, %v1060
        %v1062 = vpop.f32.mrb[0].mxu0
        %1063 = vmatprep.mubr.f32.mxu0 0.0
        %1064 = vmatmul.mubr.f32.gmra.mrb[0].mxu0 %v963
        %v1065 = vpop.f32.mrb[0].mxu0
        %v1066 = vadd.f32 0.0, %v1065
        %v1067 = vpop.f32.mrb[0].mxu0
        %1068 = vmatprep.mubr.f32.mxu0 0.0
        %1069 = vmatmul.mubr.f32.gmra.mrb[0].mxu0 %v964
        %v1070 = vpop.f32.mrb[0].mxu0
        %v1071 = vadd.f32 0.0, %v1070
        %v1072 = vpop.f32.mrb[0].mxu0
        %1073 = vmatprep.mubr.f32.mxu0 0.0
        %1074 = vmatmul.mubr.f32.gmra.mrb[0].mxu0 %v965
        %v1075 = vpop.f32.mrb[0].mxu0
        %v1076 = vadd.f32 0.0, %v1075
        %v1077 = vpop.f32.mrb[0].mxu0
        %1078 = vmatprep.mubr.f32.mxu0 0.0
        %1079 = vmatmul.mubr.f32.gmra.mrb[0].mxu0 %v966
        %v1080 = vpop.f32.mrb[0].mxu0
        %v1081 = vadd.f32 0.0, %v1080
        %v1082 = vpop.f32.mrb[0].mxu0
        %1083 = vmatprep.mubr.f32.mxu0 0.0
        %1084 = vmatmul.mubr.f32.gmra.mrb[0].mxu0 %v967
        %v1085 = vpop.f32.mrb[0].mxu0
        %v1086 = vadd.f32 0.0, %v1085
        %v1087 = vpop.f32.mrb[0].mxu0
        %1088 = vmatprep.mubr.f32.mxu0 0.0
        %1089 = vmatmul.mubr.f32.gmra.mrb[0].mxu0 %v968
        %v1090 = vpop.f32.mrb[0].mxu0
        %v1091 = vadd.f32 0.0, %v1090
        %v1092 = vpop.f32.mrb[0].mxu0
        %1093 = vmatprep.mubr.f32.mxu0 0.0
        %1094 = vmatmul.mubr.f32.gmra.mrb[0].mxu0 %v969
        %v1095 = vpop.f32.mrb[0].mxu0
        %v1096 = vadd.f32 0.0, %v1095
        %v1097 = vpop.f32.mrb[0].mxu0
        %1098 = vmatprep.mubr.f32.mxu0 0.0
        %1099 = vmatmul.mubr.f32.gmra.mrb[0].mxu0 %v970
        %v1100 = vpop.f32.mrb[0].mxu0
        %v1101 = vadd.f32 0.0, %v1100
        %v1102 = vpop.f32.mrb[0].mxu0
        %1103 = vmatprep.mubr.f32.mxu0 0.0
        %1104 = vmatmul.mubr.f32.gmra.mrb[0].mxu0 %v971
        %v1105 = vpop.f32.mrb[0].mxu0
        %v1106 = vadd.f32 0.0, %v1105
        %v1107 = vpop.f32.mrb[0].mxu0
        %1108 = vmatprep.mubr.f32.mxu0 0.0
        %1109 = vmatmul.mubr.f32.gmra.mrb[0].mxu0 %v972
        %v1110 = vpop.f32.mrb[0].mxu0
        %v1111 = vadd.f32 0.0, %v1110
        %v1112 = vpop.f32.mrb[0].mxu0
        %1113 = vmatprep.mubr.f32.mxu0 0.0
        %1114 = vmatmul.mubr.f32.gmra.mrb[0].mxu0 %v973
        %v1115 = vpop.f32.mrb[0].mxu0
        %v1116 = vadd.f32 0.0, %v1115
        %v1117 = vpop.f32.mrb[0].mxu0
        %1118 = vmatprep.mubr.f32.mxu0 0.0
        %1119 = vmatmul.mubr.f32.gmra.mrb[0].mxu0 %v974
        %v1120 = vpop.f32.mrb[0].mxu0
        %v1121 = vadd.f32 0.0, %v1120
        %v1122 = vpop.f32.mrb[0].mxu0
        %1123 = vmatprep.mubr.f32.mxu0 0.0
        %1124 = vmatmul.mubr.f32.gmra.mrb[0].mxu0 %v975
        %v1125 = vpop.f32.mrb[0].mxu0
        %v1126 = vadd.f32 0.0, %v1125
        %v1127 = vpop.f32.mrb[0].mxu0
        %1128 = vmatprep.mubr.f32.mxu0 0.0
        %1129 = vmatmul.mubr.f32.gmra.mrb[0].mxu0 %v976
        %v1130 = vpop.f32.mrb[0].mxu0
        %v1131 = vadd.f32 0.0, %v1130
        %v1132 = vpop.f32.mrb[0].mxu0
        %1133 = vmatprep.mubr.f32.mxu0 0.0
        %1134 = vmatmul.mubr.f32.gmra.mrb[0].mxu0 %v977
        %v1135 = vpop.f32.mrb[0].mxu0
        %v1136 = vadd.f32 0.0, %v1135
        %v1137 = vpop.f32.mrb[0].mxu0
        %1138 = vmatprep.mubr.f32.mxu0 0.0
        %1139 = vmatmul.mubr.f32.gmra.mrb[0].mxu0 %v978
        %v1140 = vpop.f32.mrb[0].mxu0
        %v1141 = vadd.f32 0.0, %v1140
        %v1142 = vpop.f32.mrb[0].mxu0
        %1143 = vmatprep.mubr.f32.mxu0 0.0
        %1144 = vmatmul.mubr.f32.gmra.mrb[0].mxu0 %v979
        %v1145 = vpop.f32.mrb[0].mxu0
        %v1146 = vadd.f32 0.0, %v1145
        %v1147 = vpop.f32.mrb[0].mxu0
        %1148 = vmatprep.mubr.f32.mxu0 0.0
        %1149 = vmatmul.mubr.f32.gmra.mrb[0].mxu0 %v980
        %v1150 = vpop.f32.mrb[0].mxu0
        %v1151 = vadd.f32 0.0, %v1150
        %v1152 = vpop.f32.mrb[0].mxu0
        %1153 = vmatprep.mubr.f32.mxu0 0.0
        %1154 = vmatmul.mubr.f32.gmra.mrb[0].mxu0 %v981
        %v1155 = vpop.f32.mrb[0].mxu0
        %v1156 = vadd.f32 0.0, %v1155
        %v1157 = vpop.f32.mrb[0].mxu0
        %1158 = vmatprep.mubr.f32.mxu0 0.0
        %1159 = vmatmul.mubr.f32.gmra.mrb[0].mxu0 %v982
        %v1160 = vpop.f32.mrb[0].mxu0
        %v1161 = vadd.f32 0.0, %v1160
        %v1162 = vpop.f32.mrb[0].mxu0
        %1163 = vmatprep.mubr.f32.mxu0 0.0
        %1164 = vmatmul.mubr.f32.gmra.mrb[0].mxu0 %v983
        %v1165 = vpop.f32.mrb[0].mxu0
        %v1166 = vadd.f32 0.0, %v1165
        %v1167 = vpop.f32.mrb[0].mxu0
        %1168 = vmatprep.mubr.f32.mxu0 0.0
        %1169 = vmatmul.mubr.f32.gmra.mrb[0].mxu0 %v984
        %v1170 = vpop.f32.mrb[0].mxu0
        %v1171 = vadd.f32 0.0, %v1170
        %v1172 = vpop.f32.mrb[0].mxu0
        %1173 = vmatprep.mubr.f32.mxu0 0.0
        %1174 = vmatmul.mubr.f32.gmra.mrb[0].mxu0 %v985
        %v1175 = vpop.f32.mrb[0].mxu0
        %v1176 = vadd.f32 0.0, %v1175
        %v1177 = vpop.f32.mrb[0].mxu0
        %1178 = vmatprep.mubr.f32.mxu0 0.0
        %1179 = vmatmul.mubr.f32.gmra.mrb[0].mxu0 %v986
        %v1180 = vpop.f32.mrb[0].mxu0
        %v1181 = vadd.f32 0.0, %v1180
        %v1182 = vpop.f32.mrb[0].mxu0
        %1183 = vmatprep.mubr.f32.mxu0 0.0
        %1184 = vmatmul.mubr.f32.gmra.mrb[0].mxu0 %v987
        %v1185 = vpop.f32.mrb[0].mxu0
        %v1186 = vadd.f32 0.0, %v1185
        %v1187 = vpop.f32.mrb[0].mxu0
        %1188 = vmatprep.mubr.f32.mxu0 0.0
        %1189 = vmatmul.mubr.f32.gmra.mrb[0].mxu0 %v988
        %v1190 = vpop.f32.mrb[0].mxu0
        %v1191 = vadd.f32 0.0, %v1190
        %v1192 = vpop.f32.mrb[0].mxu0
        %1193 = vmatprep.mubr.f32.mxu0 0.0
        %1194 = vmatmul.mubr.f32.gmra.mrb[0].mxu0 %v989
        %v1195 = vpop.f32.mrb[0].mxu0
        %v1196 = vadd.f32 0.0, %v1195
        %v1197 = vpop.f32.mrb[0].mxu0
        %1198 = vmatprep.mubr.f32.mxu0 0.0
        %1199 = vmatmul.mubr.f32.gmra.mrb[0].mxu0 %v990
        %v1200 = vpop.f32.mrb[0].mxu0
        %v1201 = vadd.f32 0.0, %v1200
        %v1202 = vpop.f32.mrb[0].mxu0
        %1203 = vmatprep.mubr.f32.mxu0 0.0
        %1204 = vmatmul.mubr.f32.gmra.mrb[0].mxu0 %v991
        %v1205 = vpop.f32.mrb[0].mxu0
        %v1206 = vadd.f32 0.0, %v1205
        %v1207 = vpop.f32.mrb[0].mxu0
        %1208 = vmatprep.mubr.f32.mxu0 0.0
        %1209 = vmatmul.mubr.f32.gmra.mrb[0].mxu0 %v992
        %v1210 = vpop.f32.mrb[0].mxu0
        %v1211 = vadd.f32 0.0, %v1210
        %v1212 = vpop.f32.mrb[0].mxu0
        %1213 = vmatprep.mubr.f32.mxu0 0.0
        %1214 = vmatmul.mubr.f32.gmra.mrb[0].mxu0 %v993
        %v1215 = vpop.f32.mrb[0].mxu0
        %v1216 = vadd.f32 0.0, %v1215
        %v1217 = vpop.f32.mrb[0].mxu0
        %1218 = vdwg.mxu0
        %v1219 = vmax.f32 %v1061, %v1081
        %v1220 = vmax.f32 %v1066, %v1086
        %v1221 = vmax.f32 %v1071, %v1091
        %v1222 = vmax.f32 %v1076, %v1096
        %v1223 = vmax.f32 %v1219, %v1101
        %v1224 = vmax.f32 %v1220, %v1106
        %v1225 = vmax.f32 %v1221, %v1111
        %v1226 = vmax.f32 %v1222, %v1116
        %v1227 = vmax.f32 %v1223, %v1121
        %v1228 = vmax.f32 %v1224, %v1126
        %v1229 = vmax.f32 %v1225, %v1131
        %v1230 = vmax.f32 %v1226, %v1136
        %v1231 = vmax.f32 %v1227, %v1141
        %v1232 = vmax.f32 %v1228, %v1146
        %v1233 = vmax.f32 %v1229, %v1151
        %v1234 = vmax.f32 %v1230, %v1156
        %v1235 = vmax.f32 %v1231, %v1161
        %v1236 = vmax.f32 %v1232, %v1166
        %v1237 = vmax.f32 %v1233, %v1171
        %v1238 = vmax.f32 %v1234, %v1176
        %v1239 = vmax.f32 %v1235, %v1181
        %v1240 = vmax.f32 %v1236, %v1186
        %v1241 = vmax.f32 %v1237, %v1191
        %v1242 = vmax.f32 %v1238, %v1196
        %v1243 = vmax.f32 %v1239, %v1201
        %v1244 = vmax.f32 %v1240, %v1206
        %v1245 = vmax.f32 %v1241, %v1211
        %v1246 = vmax.f32 %v1242, %v1216
        %v1247 = vmax.f32 %v1243, %v1244
        %v1248 = vmax.f32 %v1245, %v1246
        %v1249 = vmax.f32 %v1247, %v1248
        %v1250 = vrot.slane %v1249, 4
        %v1251 = vmax.f32 %v1249, %v1250
        %v1252 = vrot.slane %v1251, 2
        %v1253 = vmax.f32 %v1251, %v1252
        %v1254 = vrot.slane %v1253, 1
        %v1255 = vmax.f32 %v1253, %v1254
        %v1256 = vsub.f32 %v1061, %v1255
        %v1257 = vsub.f32 %v1066, %v1255
        %v1258 = vsub.f32 %v1071, %v1255
        %v1259 = vsub.f32 %v1076, %v1255
        %v1260 = vsub.f32 %v1081, %v1255
        %v1261 = vsub.f32 %v1086, %v1255
        %v1262 = vsub.f32 %v1091, %v1255
        %v1263 = vsub.f32 %v1096, %v1255
        %v1264 = vsub.f32 %v1101, %v1255
        %v1265 = vsub.f32 %v1106, %v1255
        %v1266 = vsub.f32 %v1111, %v1255
        %v1267 = vsub.f32 %v1116, %v1255
        %v1268 = vsub.f32 %v1121, %v1255
        %v1269 = vsub.f32 %v1126, %v1255
        %v1270 = vsub.f32 %v1131, %v1255
        %v1271 = vsub.f32 %v1136, %v1255
        %v1272 = vsub.f32 %v1141, %v1255
        %v1273 = vsub.f32 %v1146, %v1255
        %v1274 = vsub.f32 %v1151, %v1255
        %v1275 = vsub.f32 %v1156, %v1255
        %v1276 = vsub.f32 %v1161, %v1255
        %v1277 = vsub.f32 %v1166, %v1255
        %v1278 = vsub.f32 %v1171, %v1255
        %v1279 = vsub.f32 %v1176, %v1255
        %v1280 = vsub.f32 %v1181, %v1255
        %v1281 = vsub.f32 %v1186, %v1255
        %v1282 = vsub.f32 %v1191, %v1255
        %v1283 = vsub.f32 %v1196, %v1255
        %v1284 = vsub.f32 %v1201, %v1255
        %v1285 = vsub.f32 %v1206, %v1255
        %v1286 = vsub.f32 %v1211, %v1255
        %v1287 = vsub.f32 %v1216, %v1255
        %v1288 = vmul.f32 %v1256, 1.442695
        %v1289 = vpow.pop %v1288
        %v1290 = vmul.f32 %v1257, 1.442695
        %v1291 = vpow.pop %v1290
        %v1292 = vmul.f32 %v1258, 1.442695
        %v1293 = vpow.pop %v1292
        %v1294 = vmul.f32 %v1259, 1.442695
        %v1295 = vpow.pop %v1294
        %v1296 = vmul.f32 %v1260, 1.442695
        %v1297 = vpow.pop %v1296
        %v1298 = vmul.f32 %v1261, 1.442695
        %v1299 = vpow.pop %v1298
        %v1300 = vmul.f32 %v1262, 1.442695
        %v1301 = vpow.pop %v1300
        %v1302 = vmul.f32 %v1263, 1.442695
        %v1303 = vpow.pop %v1302
        %v1304 = vmul.f32 %v1264, 1.442695
        %v1305 = vpow.pop %v1304
        %v1306 = vmul.f32 %v1265, 1.442695
        %v1307 = vpow.pop %v1306
        %v1308 = vmul.f32 %v1266, 1.442695
        %v1309 = vpow.pop %v1308
        %v1310 = vmul.f32 %v1267, 1.442695
        %v1311 = vpow.pop %v1310
        %v1312 = vmul.f32 %v1268, 1.442695
        %v1313 = vpow.pop %v1312
        %v1314 = vmul.f32 %v1269, 1.442695
        %v1315 = vpow.pop %v1314
        %v1316 = vmul.f32 %v1270, 1.442695
        %v1317 = vpow.pop %v1316
        %v1318 = vmul.f32 %v1271, 1.442695
        %v1319 = vpow.pop %v1318
        %v1320 = vmul.f32 %v1272, 1.442695
        %v1321 = vpow.pop %v1320
        %v1322 = vmul.f32 %v1273, 1.442695
        %v1323 = vpow.pop %v1322
        %v1324 = vmul.f32 %v1274, 1.442695
        %v1325 = vpow.pop %v1324
        %v1326 = vmul.f32 %v1275, 1.442695
        %v1327 = vpow.pop %v1326
        %v1328 = vmul.f32 %v1276, 1.442695
        %v1329 = vpow.pop %v1328
        %v1330 = vmul.f32 %v1277, 1.442695
        %v1331 = vpow.pop %v1330
        %v1332 = vmul.f32 %v1278, 1.442695
        %v1333 = vpow.pop %v1332
        %v1334 = vmul.f32 %v1279, 1.442695
        %v1335 = vpow.pop %v1334
        %v1336 = vmul.f32 %v1280, 1.442695
        %v1337 = vpow.pop %v1336
        %v1338 = vmul.f32 %v1281, 1.442695
        %v1339 = vpow.pop %v1338
        %v1340 = vmul.f32 %v1282, 1.442695
        %v1341 = vpow.pop %v1340
        %v1342 = vmul.f32 %v1283, 1.442695
        %v1343 = vpow.pop %v1342
        %v1344 = vmul.f32 %v1284, 1.442695
        %v1345 = vpow.pop %v1344
        %v1346 = vmul.f32 %v1285, 1.442695
        %v1347 = vpow.pop %v1346
        %v1348 = vmul.f32 %v1286, 1.442695
        %v1349 = vpow.pop %v1348
        %v1350 = vmul.f32 %v1287, 1.442695
        %v1351 = vpow.pop %v1350
        %v1352 = vadd.f32 %v1289, %v1291
        %v1353 = vadd.f32 %v1352, %v1293
        %v1354 = vadd.f32 %v1353, %v1295
        %v1355 = vadd.f32 %v1354, %v1297
        %v1356 = vadd.f32 %v1355, %v1299
        %v1357 = vadd.f32 %v1356, %v1301
        %v1358 = vadd.f32 %v1357, %v1303
        %v1359 = vadd.f32 %v1358, %v1305
        %v1360 = vadd.f32 %v1359, %v1307
        %v1361 = vadd.f32 %v1360, %v1309
        %v1362 = vadd.f32 %v1361, %v1311
        %v1363 = vadd.f32 %v1362, %v1313
        %v1364 = vadd.f32 %v1363, %v1315
        %v1365 = vadd.f32 %v1364, %v1317
        %v1366 = vadd.f32 %v1365, %v1319
        %v1367 = vadd.f32 %v1366, %v1321
        %v1368 = vadd.f32 %v1367, %v1323
        %v1369 = vadd.f32 %v1368, %v1325
        %v1370 = vadd.f32 %v1369, %v1327
        %v1371 = vadd.f32 %v1370, %v1329
        %v1372 = vadd.f32 %v1371, %v1331
        %v1373 = vadd.f32 %v1372, %v1333
        %v1374 = vadd.f32 %v1373, %v1335
        %v1375 = vadd.f32 %v1374, %v1337
        %v1376 = vadd.f32 %v1375, %v1339
        %v1377 = vadd.f32 %v1376, %v1341
        %v1378 = vadd.f32 %v1377, %v1343
        %v1379 = vadd.f32 %v1378, %v1345
        %v1380 = vadd.f32 %v1379, %v1347
        %v1381 = vadd.f32 %v1380, %v1349
        %v1382 = vadd.f32 %v1381, %v1351
        %v1383 = vrot.slane %v1382, 4
        %v1384 = vadd.f32 %v1382, %v1383
        %v1385 = vrot.slane %v1384, 2
        %v1386 = vadd.f32 %v1384, %v1385
        %v1387 = vrot.slane %v1386, 1
        %v1388 = vadd.f32 %v1386, %v1387
        %v1389 = vrcp.pop %v1388
        %v1390 = vmul.f32 %v884, %v1389
        %v1391 = vmul.f32 %v889, %v1389
        %v1392 = vmul.f32 %v894, %v1389
        %v1393 = vmul.f32 %v899, %v1389
        %v1394 = vmul.f32 %v904, %v1389
        %v1395 = vmul.f32 %v909, %v1389
        %v1396 = vmul.f32 %v914, %v1389
        %v1397 = vmul.f32 %v919, %v1389
        %v1398 = vmul.f32 %v924, %v1389
        %v1399 = vmul.f32 %v929, %v1389
        %v1400 = vmul.f32 %v934, %v1389
        %v1401 = vmul.f32 %v939, %v1389
        %v1402 = vmul.f32 %v944, %v1389
        %v1403 = vmul.f32 %v949, %v1389
        %v1404 = vmul.f32 %v954, %v1389
        %v1405 = vmul.f32 %v959, %v1389
        %1406 = vmatprep.subr.mxu0 0.0
        %1407 = vmatpush1.xpose.msra.mxu0 %v1390
        %1408 = vmatprep.subr.mxu0 0.0
        %1409 = vmatpush1.xpose.msra.mxu0 %v1391
        %1410 = vmatprep.subr.mxu0 0.0
        %1411 = vmatpush1.xpose.msra.mxu0 %v1392
        %1412 = vmatprep.subr.mxu0 0.0
        %1413 = vmatpush1.xpose.msra.mxu0 %v1393
        %1414 = vmatprep.subr.mxu0 0.0
        %1415 = vmatpush1.xpose.msra.mxu0 %v1394
        %1416 = vmatprep.subr.mxu0 0.0
        %1417 = vmatpush1.xpose.msra.mxu0 %v1395
        %1418 = vmatprep.subr.mxu0 0.0
        %1419 = vmatpush1.xpose.msra.mxu0 %v1396
        %1420 = vmatprep.subr.mxu0 0.0
        %1421 = vmatpush1.xpose.msra.mxu0 %v1397
        %1422 = vmatprep.subr.mxu0 0.0
        %1423 = vmatpush1.xpose.msra.mxu0 %v1398
        %1424 = vmatprep.subr.mxu0 0.0
        %1425 = vmatpush1.xpose.msra.mxu0 %v1399
        %1426 = vmatprep.subr.mxu0 0.0
        %1427 = vmatpush1.xpose.msra.mxu0 %v1400
        %1428 = vmatprep.subr.mxu0 0.0
        %1429 = vmatpush1.xpose.msra.mxu0 %v1401
        %1430 = vmatprep.subr.mxu0 0.0
        %1431 = vmatpush1.xpose.msra.mxu0 %v1402
        %1432 = vmatprep.subr.mxu0 0.0
        %1433 = vmatpush1.xpose.msra.mxu0 %v1403
        %1434 = vmatprep.subr.mxu0 0.0
        %1435 = vmatpush1.xpose.msra.mxu0 %v1404
        %1436 = vmatprep.subr.mxu0 0.0
        %1437 = vmatpush1.xpose.msra.mxu0 %v1405
        %1438 = vmatprep.subr.mxu0 0.0
        %1439 = vmatpush1.xpose.msra.mxu0 0.0
        %1440 = vmatprep.subr.mxu0 0.0
        %1441 = vmatpush1.xpose.msra.mxu0 0.0
        %1442 = vmatprep.subr.mxu0 0.0
        %1443 = vmatpush1.xpose.msra.mxu0 0.0
        %1444 = vmatprep.subr.mxu0 0.0
        %1445 = vmatpush1.xpose.msra.mxu0 0.0
        %1446 = vmatprep.subr.mxu0 0.0
        %1447 = vmatpush1.xpose.msra.mxu0 0.0
        %1448 = vmatprep.subr.mxu0 0.0
        %1449 = vmatpush1.xpose.msra.mxu0 0.0
        %1450 = vmatprep.subr.mxu0 0.0
        %1451 = vmatpush1.xpose.msra.mxu0 0.0
        %1452 = vmatprep.subr.mxu0 0.0
        %1453 = vmatpush1.xpose.msra.mxu0 0.0
        %1454 = vmatprep.subr.mxu0 0.0
        %1455 = vmatpush1.xpose.msra.mxu0 0.0
        %1456 = vmatprep.subr.mxu0 0.0
        %1457 = vmatpush1.xpose.msra.mxu0 0.0
        %1458 = vmatprep.subr.mxu0 0.0
        %1459 = vmatpush1.xpose.msra.mxu0 0.0
        %1460 = vmatprep.subr.mxu0 0.0
        %1461 = vmatpush1.xpose.msra.mxu0 0.0
        %1462 = vmatprep.subr.mxu0 0.0
        %1463 = vmatpush1.xpose.msra.mxu0 0.0
        %1464 = vmatprep.subr.mxu0 0.0
        %1465 = vmatpush1.xpose.msra.mxu0 0.0
        %1466 = vmatprep.subr.mxu0 0.0
        %1467 = vmatpush1.xpose.msra.mxu0 0.0
        %1468 = vmatprep.subr.mxu0 0.0
        %1469 = vmatpush1.xpose.msra.mxu0 0.0
        %1470 = vmatprep.mubr.f32.mxu0 0.0
        %1471 = vmatmul.mubr.f32.gmra.mrb[0].mxu0 %v1289
        %v1472 = vpop.f32.mrb[0].mxu0
        %v1473 = vadd.f32 0.0, %v1472
        %v1474 = vpop.f32.mrb[0].mxu0
        %1475 = vmatprep.mubr.f32.mxu0 0.0
        %1476 = vmatmul.mubr.f32.gmra.mrb[0].mxu0 %v1291
        %v1477 = vpop.f32.mrb[0].mxu0
        %v1478 = vadd.f32 0.0, %v1477
        %v1479 = vpop.f32.mrb[0].mxu0
        %1480 = vmatprep.mubr.f32.mxu0 0.0
        %1481 = vmatmul.mubr.f32.gmra.mrb[0].mxu0 %v1293
        %v1482 = vpop.f32.mrb[0].mxu0
        %v1483 = vadd.f32 0.0, %v1482
        %v1484 = vpop.f32.mrb[0].mxu0
        %1485 = vmatprep.mubr.f32.mxu0 0.0
        %1486 = vmatmul.mubr.f32.gmra.mrb[0].mxu0 %v1295
        %v1487 = vpop.f32.mrb[0].mxu0
        %v1488 = vadd.f32 0.0, %v1487
        %v1489 = vpop.f32.mrb[0].mxu0
        %1490 = vmatprep.mubr.f32.mxu0 0.0
        %1491 = vmatmul.mubr.f32.gmra.mrb[0].mxu0 %v1297
        %v1492 = vpop.f32.mrb[0].mxu0
        %v1493 = vadd.f32 0.0, %v1492
        %v1494 = vpop.f32.mrb[0].mxu0
        %1495 = vmatprep.mubr.f32.mxu0 0.0
        %1496 = vmatmul.mubr.f32.gmra.mrb[0].mxu0 %v1299
        %v1497 = vpop.f32.mrb[0].mxu0
        %v1498 = vadd.f32 0.0, %v1497
        %v1499 = vpop.f32.mrb[0].mxu0
        %1500 = vmatprep.mubr.f32.mxu0 0.0
        %1501 = vmatmul.mubr.f32.gmra.mrb[0].mxu0 %v1301
        %v1502 = vpop.f32.mrb[0].mxu0
        %v1503 = vadd.f32 0.0, %v1502
        %v1504 = vpop.f32.mrb[0].mxu0
        %1505 = vmatprep.mubr.f32.mxu0 0.0
        %1506 = vmatmul.mubr.f32.gmra.mrb[0].mxu0 %v1303
        %v1507 = vpop.f32.mrb[0].mxu0
        %v1508 = vadd.f32 0.0, %v1507
        %v1509 = vpop.f32.mrb[0].mxu0
        %1510 = vmatprep.mubr.f32.mxu0 0.0
        %1511 = vmatmul.mubr.f32.gmra.mrb[0].mxu0 %v1305
        %v1512 = vpop.f32.mrb[0].mxu0
        %v1513 = vadd.f32 0.0, %v1512
        %v1514 = vpop.f32.mrb[0].mxu0
        %1515 = vmatprep.mubr.f32.mxu0 0.0
        %1516 = vmatmul.mubr.f32.gmra.mrb[0].mxu0 %v1307
        %v1517 = vpop.f32.mrb[0].mxu0
        %v1518 = vadd.f32 0.0, %v1517
        %v1519 = vpop.f32.mrb[0].mxu0
        %1520 = vmatprep.mubr.f32.mxu0 0.0
        %1521 = vmatmul.mubr.f32.gmra.mrb[0].mxu0 %v1309
        %v1522 = vpop.f32.mrb[0].mxu0
        %v1523 = vadd.f32 0.0, %v1522
        %v1524 = vpop.f32.mrb[0].mxu0
        %1525 = vmatprep.mubr.f32.mxu0 0.0
        %1526 = vmatmul.mubr.f32.gmra.mrb[0].mxu0 %v1311
        %v1527 = vpop.f32.mrb[0].mxu0
        %v1528 = vadd.f32 0.0, %v1527
        %v1529 = vpop.f32.mrb[0].mxu0
        %1530 = vmatprep.mubr.f32.mxu0 0.0
        %1531 = vmatmul.mubr.f32.gmra.mrb[0].mxu0 %v1313
        %v1532 = vpop.f32.mrb[0].mxu0
        %v1533 = vadd.f32 0.0, %v1532
        %v1534 = vpop.f32.mrb[0].mxu0
        %1535 = vmatprep.mubr.f32.mxu0 0.0
        %1536 = vmatmul.mubr.f32.gmra.mrb[0].mxu0 %v1315
        %v1537 = vpop.f32.mrb[0].mxu0
        %v1538 = vadd.f32 0.0, %v1537
        %v1539 = vpop.f32.mrb[0].mxu0
        %1540 = vmatprep.mubr.f32.mxu0 0.0
        %1541 = vmatmul.mubr.f32.gmra.mrb[0].mxu0 %v1317
        %v1542 = vpop.f32.mrb[0].mxu0
        %v1543 = vadd.f32 0.0, %v1542
        %v1544 = vpop.f32.mrb[0].mxu0
        %1545 = vmatprep.mubr.f32.mxu0 0.0
        %1546 = vmatmul.mubr.f32.gmra.mrb[0].mxu0 %v1319
        %v1547 = vpop.f32.mrb[0].mxu0
        %v1548 = vadd.f32 0.0, %v1547
        %v1549 = vpop.f32.mrb[0].mxu0
        %1550 = vmatprep.mubr.f32.mxu0 0.0
        %1551 = vmatmul.mubr.f32.gmra.mrb[0].mxu0 %v1321
        %v1552 = vpop.f32.mrb[0].mxu0
        %v1553 = vadd.f32 0.0, %v1552
        %v1554 = vpop.f32.mrb[0].mxu0
        %1555 = vmatprep.mubr.f32.mxu0 0.0
        %1556 = vmatmul.mubr.f32.gmra.mrb[0].mxu0 %v1323
        %v1557 = vpop.f32.mrb[0].mxu0
        %v1558 = vadd.f32 0.0, %v1557
        %v1559 = vpop.f32.mrb[0].mxu0
        %1560 = vmatprep.mubr.f32.mxu0 0.0
        %1561 = vmatmul.mubr.f32.gmra.mrb[0].mxu0 %v1325
        %v1562 = vpop.f32.mrb[0].mxu0
        %v1563 = vadd.f32 0.0, %v1562
        %v1564 = vpop.f32.mrb[0].mxu0
        %1565 = vmatprep.mubr.f32.mxu0 0.0
        %1566 = vmatmul.mubr.f32.gmra.mrb[0].mxu0 %v1327
        %v1567 = vpop.f32.mrb[0].mxu0
        %v1568 = vadd.f32 0.0, %v1567
        %v1569 = vpop.f32.mrb[0].mxu0
        %1570 = vmatprep.mubr.f32.mxu0 0.0
        %1571 = vmatmul.mubr.f32.gmra.mrb[0].mxu0 %v1329
        %v1572 = vpop.f32.mrb[0].mxu0
        %v1573 = vadd.f32 0.0, %v1572
        %v1574 = vpop.f32.mrb[0].mxu0
        %1575 = vmatprep.mubr.f32.mxu0 0.0
        %1576 = vmatmul.mubr.f32.gmra.mrb[0].mxu0 %v1331
        %v1577 = vpop.f32.mrb[0].mxu0
        %v1578 = vadd.f32 0.0, %v1577
        %v1579 = vpop.f32.mrb[0].mxu0
        %1580 = vmatprep.mubr.f32.mxu0 0.0
        %1581 = vmatmul.mubr.f32.gmra.mrb[0].mxu0 %v1333
        %v1582 = vpop.f32.mrb[0].mxu0
        %v1583 = vadd.f32 0.0, %v1582
        %v1584 = vpop.f32.mrb[0].mxu0
        %1585 = vmatprep.mubr.f32.mxu0 0.0
        %1586 = vmatmul.mubr.f32.gmra.mrb[0].mxu0 %v1335
        %v1587 = vpop.f32.mrb[0].mxu0
        %v1588 = vadd.f32 0.0, %v1587
        %v1589 = vpop.f32.mrb[0].mxu0
        %1590 = vmatprep.mubr.f32.mxu0 0.0
        %1591 = vmatmul.mubr.f32.gmra.mrb[0].mxu0 %v1337
        %v1592 = vpop.f32.mrb[0].mxu0
        %v1593 = vadd.f32 0.0, %v1592
        %v1594 = vpop.f32.mrb[0].mxu0
        %1595 = vmatprep.mubr.f32.mxu0 0.0
        %1596 = vmatmul.mubr.f32.gmra.mrb[0].mxu0 %v1339
        %v1597 = vpop.f32.mrb[0].mxu0
        %v1598 = vadd.f32 0.0, %v1597
        %v1599 = vpop.f32.mrb[0].mxu0
        %1600 = vmatprep.mubr.f32.mxu0 0.0
        %1601 = vmatmul.mubr.f32.gmra.mrb[0].mxu0 %v1341
        %v1602 = vpop.f32.mrb[0].mxu0
        %v1603 = vadd.f32 0.0, %v1602
        %v1604 = vpop.f32.mrb[0].mxu0
        %1605 = vmatprep.mubr.f32.mxu0 0.0
        %1606 = vmatmul.mubr.f32.gmra.mrb[0].mxu0 %v1343
        %v1607 = vpop.f32.mrb[0].mxu0
        %v1608 = vadd.f32 0.0, %v1607
        %v1609 = vpop.f32.mrb[0].mxu0
        %1610 = vmatprep.mubr.f32.mxu0 0.0
        %1611 = vmatmul.mubr.f32.gmra.mrb[0].mxu0 %v1345
        %v1612 = vpop.f32.mrb[0].mxu0
        %v1613 = vadd.f32 0.0, %v1612
        %v1614 = vpop.f32.mrb[0].mxu0
        %1615 = vmatprep.mubr.f32.mxu0 0.0
        %1616 = vmatmul.mubr.f32.gmra.mrb[0].mxu0 %v1347
        %v1617 = vpop.f32.mrb[0].mxu0
        %v1618 = vadd.f32 0.0, %v1617
        %v1619 = vpop.f32.mrb[0].mxu0
        %1620 = vmatprep.mubr.f32.mxu0 0.0
        %1621 = vmatmul.mubr.f32.gmra.mrb[0].mxu0 %v1349
        %v1622 = vpop.f32.mrb[0].mxu0
        %v1623 = vadd.f32 0.0, %v1622
        %v1624 = vpop.f32.mrb[0].mxu0
        %1625 = vmatprep.mubr.f32.mxu0 0.0
        %1626 = vmatmul.mubr.f32.gmra.mrb[0].mxu0 %v1351
        %v1627 = vpop.f32.mrb[0].mxu0
        %v1628 = vadd.f32 0.0, %v1627
        %v1629 = vpop.f32.mrb[0].mxu0
        %1630 = vdwg.mxu0
        // Predicated region
        $region65: #{tpu_custom_call.1} parent=39 // pred_check
          %p1631 = pneg %p313
        $region66: #{tpu_custom_call.1} parent=39 // pred_check_branch
          %1633 = sbr.rel (%p1631) target = $region68
        $region67: #{tpu_custom_call.1} parent=39 // pred_region
          %1634 = vst [vmem:[#allocation3] sm:$0xff] %v1473
          %1635 = vst [vmem:[#allocation3 + $0x8] sm:$0xff] %v1478
          %1636 = vst [vmem:[#allocation3 + $0x10] sm:$0xff] %v1483
          %1637 = vst [vmem:[#allocation3 + $0x18] sm:$0xff] %v1488
          %1638 = vst [vmem:[#allocation3 + $0x20] sm:$0xff] %v1493
          %1639 = vst [vmem:[#allocation3 + $0x28] sm:$0xff] %v1498
          %1640 = vst [vmem:[#allocation3 + $0x30] sm:$0xff] %v1503
          %1641 = vst [vmem:[#allocation3 + $0x38] sm:$0xff] %v1508
          %1642 = vst [vmem:[#allocation3 + $0x40] sm:$0xff] %v1513
          %1643 = vst [vmem:[#allocation3 + $0x48] sm:$0xff] %v1518
          %1644 = vst [vmem:[#allocation3 + $0x50] sm:$0xff] %v1523
          %1645 = vst [vmem:[#allocation3 + $0x58] sm:$0xff] %v1528
          %1646 = vst [vmem:[#allocation3 + $0x60] sm:$0xff] %v1533
          %1647 = vst [vmem:[#allocation3 + $0x68] sm:$0xff] %v1538
          %1648 = vst [vmem:[#allocation3 + $0x70] sm:$0xff] %v1543
          %1649 = vst [vmem:[#allocation3 + $0x78] sm:$0xff] %v1548
          %1650 = vst [vmem:[#allocation3 + $0x80] sm:$0xff] %v1553
          %1651 = vst [vmem:[#allocation3 + $0x88] sm:$0xff] %v1558
          %1652 = vst [vmem:[#allocation3 + $0x90] sm:$0xff] %v1563
          %1653 = vst [vmem:[#allocation3 + $0x98] sm:$0xff] %v1568
          %1654 = vst [vmem:[#allocation3 + $0xa0] sm:$0xff] %v1573
          %1655 = vst [vmem:[#allocation3 + $0xa8] sm:$0xff] %v1578
          %1656 = vst [vmem:[#allocation3 + $0xb0] sm:$0xff] %v1583
          %1657 = vst [vmem:[#allocation3 + $0xb8] sm:$0xff] %v1588
          %1658 = vst [vmem:[#allocation3 + $0xc0] sm:$0xff] %v1593
          %1659 = vst [vmem:[#allocation3 + $0xc8] sm:$0xff] %v1598
          %1660 = vst [vmem:[#allocation3 + $0xd0] sm:$0xff] %v1603
          %1661 = vst [vmem:[#allocation3 + $0xd8] sm:$0xff] %v1608
          %1662 = vst [vmem:[#allocation3 + $0xe0] sm:$0xff] %v1613
          %1663 = vst [vmem:[#allocation3 + $0xe8] sm:$0xff] %v1618
          %1664 = vst [vmem:[#allocation3 + $0xf0] sm:$0xff] %v1623
          %1665 = vst [vmem:[#allocation3 + $0xf8] sm:$0xff] %v1628
        $region68: #{tpu_custom_call.1} parent=39 // pred_fallthru
          _
        %p1666 = scmp.gt.s32.totalorder %s29, 0
        // Predicated region
        $region69: #{tpu_custom_call.1} parent=39 // pred_check
          %p1667 = pneg %p1666
        $region70: #{tpu_custom_call.1} parent=39 // pred_check_branch
          %1669 = sbr.rel (%p1667) target = $region72
        $region71: #{tpu_custom_call.1} parent=39 // pred_region
          %v1670 = vld [vmem:[#allocation3] sm:$0xff]
          %v1671 = vld [vmem:[#allocation3 + $0x8] sm:$0xff]
          %v1672 = vld [vmem:[#allocation3 + $0x10] sm:$0xff]
          %v1673 = vld [vmem:[#allocation3 + $0x18] sm:$0xff]
          %v1674 = vld [vmem:[#allocation3 + $0x20] sm:$0xff]
          %v1675 = vld [vmem:[#allocation3 + $0x28] sm:$0xff]
          %v1676 = vld [vmem:[#allocation3 + $0x30] sm:$0xff]
          %v1677 = vld [vmem:[#allocation3 + $0x38] sm:$0xff]
          %v1678 = vld [vmem:[#allocation3 + $0x40] sm:$0xff]
          %v1679 = vld [vmem:[#allocation3 + $0x48] sm:$0xff]
          %v1680 = vld [vmem:[#allocation3 + $0x50] sm:$0xff]
          %v1681 = vld [vmem:[#allocation3 + $0x58] sm:$0xff]
          %v1682 = vld [vmem:[#allocation3 + $0x60] sm:$0xff]
          %v1683 = vld [vmem:[#allocation3 + $0x68] sm:$0xff]
          %v1684 = vld [vmem:[#allocation3 + $0x70] sm:$0xff]
          %v1685 = vld [vmem:[#allocation3 + $0x78] sm:$0xff]
          %v1686 = vld [vmem:[#allocation3 + $0x80] sm:$0xff]
          %v1687 = vld [vmem:[#allocation3 + $0x88] sm:$0xff]
          %v1688 = vld [vmem:[#allocation3 + $0x90] sm:$0xff]
          %v1689 = vld [vmem:[#allocation3 + $0x98] sm:$0xff]
          %v1690 = vld [vmem:[#allocation3 + $0xa0] sm:$0xff]
          %v1691 = vld [vmem:[#allocation3 + $0xa8] sm:$0xff]
          %v1692 = vld [vmem:[#allocation3 + $0xb0] sm:$0xff]
          %v1693 = vld [vmem:[#allocation3 + $0xb8] sm:$0xff]
          %v1694 = vld [vmem:[#allocation3 + $0xc0] sm:$0xff]
          %v1695 = vld [vmem:[#allocation3 + $0xc8] sm:$0xff]
          %v1696 = vld [vmem:[#allocation3 + $0xd0] sm:$0xff]
          %v1697 = vld [vmem:[#allocation3 + $0xd8] sm:$0xff]
          %v1698 = vld [vmem:[#allocation3 + $0xe0] sm:$0xff]
          %v1699 = vld [vmem:[#allocation3 + $0xe8] sm:$0xff]
          %v1700 = vld [vmem:[#allocation3 + $0xf0] sm:$0xff]
          %v1701 = vld [vmem:[#allocation3 + $0xf8] sm:$0xff]
          %v1702 = vadd.f32 %v1670, %v1473
          %v1703 = vadd.f32 %v1671, %v1478
          %v1704 = vadd.f32 %v1672, %v1483
          %v1705 = vadd.f32 %v1673, %v1488
          %v1706 = vadd.f32 %v1674, %v1493
          %v1707 = vadd.f32 %v1675, %v1498
          %v1708 = vadd.f32 %v1676, %v1503
          %v1709 = vadd.f32 %v1677, %v1508
          %v1710 = vadd.f32 %v1678, %v1513
          %v1711 = vadd.f32 %v1679, %v1518
          %v1712 = vadd.f32 %v1680, %v1523
          %v1713 = vadd.f32 %v1681, %v1528
          %v1714 = vadd.f32 %v1682, %v1533
          %v1715 = vadd.f32 %v1683, %v1538
          %v1716 = vadd.f32 %v1684, %v1543
          %v1717 = vadd.f32 %v1685, %v1548
          %v1718 = vadd.f32 %v1686, %v1553
          %v1719 = vadd.f32 %v1687, %v1558
          %v1720 = vadd.f32 %v1688, %v1563
          %v1721 = vadd.f32 %v1689, %v1568
          %v1722 = vadd.f32 %v1690, %v1573
          %v1723 = vadd.f32 %v1691, %v1578
          %v1724 = vadd.f32 %v1692, %v1583
          %v1725 = vadd.f32 %v1693, %v1588
          %v1726 = vadd.f32 %v1694, %v1593
          %v1727 = vadd.f32 %v1695, %v1598
          %v1728 = vadd.f32 %v1696, %v1603
          %v1729 = vadd.f32 %v1697, %v1608
          %v1730 = vadd.f32 %v1698, %v1613
          %v1731 = vadd.f32 %v1699, %v1618
          %v1732 = vadd.f32 %v1700, %v1623
          %v1733 = vadd.f32 %v1701, %v1628
          %1734 = vst [vmem:[#allocation3] sm:$0xff] %v1702
          %1735 = vst [vmem:[#allocation3 + $0x8] sm:$0xff] %v1703
          %1736 = vst [vmem:[#allocation3 + $0x10] sm:$0xff] %v1704
          %1737 = vst [vmem:[#allocation3 + $0x18] sm:$0xff] %v1705
          %1738 = vst [vmem:[#allocation3 + $0x20] sm:$0xff] %v1706
          %1739 = vst [vmem:[#allocation3 + $0x28] sm:$0xff] %v1707
          %1740 = vst [vmem:[#allocation3 + $0x30] sm:$0xff] %v1708
          %1741 = vst [vmem:[#allocation3 + $0x38] sm:$0xff] %v1709
          %1742 = vst [vmem:[#allocation3 + $0x40] sm:$0xff] %v1710
          %1743 = vst [vmem:[#allocation3 + $0x48] sm:$0xff] %v1711
          %1744 = vst [vmem:[#allocation3 + $0x50] sm:$0xff] %v1712
          %1745 = vst [vmem:[#allocation3 + $0x58] sm:$0xff] %v1713
          %1746 = vst [vmem:[#allocation3 + $0x60] sm:$0xff] %v1714
          %1747 = vst [vmem:[#allocation3 + $0x68] sm:$0xff] %v1715
          %1748 = vst [vmem:[#allocation3 + $0x70] sm:$0xff] %v1716
          %1749 = vst [vmem:[#allocation3 + $0x78] sm:$0xff] %v1717
          %1750 = vst [vmem:[#allocation3 + $0x80] sm:$0xff] %v1718
          %1751 = vst [vmem:[#allocation3 + $0x88] sm:$0xff] %v1719
          %1752 = vst [vmem:[#allocation3 + $0x90] sm:$0xff] %v1720
          %1753 = vst [vmem:[#allocation3 + $0x98] sm:$0xff] %v1721
          %1754 = vst [vmem:[#allocation3 + $0xa0] sm:$0xff] %v1722
          %1755 = vst [vmem:[#allocation3 + $0xa8] sm:$0xff] %v1723
          %1756 = vst [vmem:[#allocation3 + $0xb0] sm:$0xff] %v1724
          %1757 = vst [vmem:[#allocation3 + $0xb8] sm:$0xff] %v1725
          %1758 = vst [vmem:[#allocation3 + $0xc0] sm:$0xff] %v1726
          %1759 = vst [vmem:[#allocation3 + $0xc8] sm:$0xff] %v1727
          %1760 = vst [vmem:[#allocation3 + $0xd0] sm:$0xff] %v1728
          %1761 = vst [vmem:[#allocation3 + $0xd8] sm:$0xff] %v1729
          %1762 = vst [vmem:[#allocation3 + $0xe0] sm:$0xff] %v1730
          %1763 = vst [vmem:[#allocation3 + $0xe8] sm:$0xff] %v1731
          %1764 = vst [vmem:[#allocation3 + $0xf0] sm:$0xff] %v1732
          %1765 = vst [vmem:[#allocation3 + $0xf8] sm:$0xff] %v1733
        $region72: #{tpu_custom_call.1} parent=39 // pred_fallthru
          _
        %p1766 = scmp.eq.s32.totalorder %s29, 1
        // Predicated region
        $region73: #{tpu_custom_call.1} parent=39 // pred_check
          %p1767 = pneg %p1766
        $region74: #{tpu_custom_call.1} parent=39 // pred_check_branch
          %1769 = sbr.rel (%p1767) target = $region76
        $region75: #{tpu_custom_call.1} parent=39 // pred_region
          %v1770 = vld [vmem:[#allocation3] sm:$0xff]
          %v1771 = vld [vmem:[#allocation3 + $0x8] sm:$0xff]
          %v1772 = vld [vmem:[#allocation3 + $0x10] sm:$0xff]
          %v1773 = vld [vmem:[#allocation3 + $0x18] sm:$0xff]
          %v1774 = vld [vmem:[#allocation3 + $0x20] sm:$0xff]
          %v1775 = vld [vmem:[#allocation3 + $0x28] sm:$0xff]
          %v1776 = vld [vmem:[#allocation3 + $0x30] sm:$0xff]
          %v1777 = vld [vmem:[#allocation3 + $0x38] sm:$0xff]
          %v1778 = vld [vmem:[#allocation3 + $0x40] sm:$0xff]
          %v1779 = vld [vmem:[#allocation3 + $0x48] sm:$0xff]
          %v1780 = vld [vmem:[#allocation3 + $0x50] sm:$0xff]
          %v1781 = vld [vmem:[#allocation3 + $0x58] sm:$0xff]
          %v1782 = vld [vmem:[#allocation3 + $0x60] sm:$0xff]
          %v1783 = vld [vmem:[#allocation3 + $0x68] sm:$0xff]
          %v1784 = vld [vmem:[#allocation3 + $0x70] sm:$0xff]
          %v1785 = vld [vmem:[#allocation3 + $0x78] sm:$0xff]
          %v1786 = vld [vmem:[#allocation3 + $0x80] sm:$0xff]
          %v1787 = vld [vmem:[#allocation3 + $0x88] sm:$0xff]
          %v1788 = vld [vmem:[#allocation3 + $0x90] sm:$0xff]
          %v1789 = vld [vmem:[#allocation3 + $0x98] sm:$0xff]
          %v1790 = vld [vmem:[#allocation3 + $0xa0] sm:$0xff]
          %v1791 = vld [vmem:[#allocation3 + $0xa8] sm:$0xff]
          %v1792 = vld [vmem:[#allocation3 + $0xb0] sm:$0xff]
          %v1793 = vld [vmem:[#allocation3 + $0xb8] sm:$0xff]
          %v1794 = vld [vmem:[#allocation3 + $0xc0] sm:$0xff]
          %v1795 = vld [vmem:[#allocation3 + $0xc8] sm:$0xff]
          %v1796 = vld [vmem:[#allocation3 + $0xd0] sm:$0xff]
          %v1797 = vld [vmem:[#allocation3 + $0xd8] sm:$0xff]
          %v1798 = vld [vmem:[#allocation3 + $0xe0] sm:$0xff]
          %v1799 = vld [vmem:[#allocation3 + $0xe8] sm:$0xff]
          %v1800 = vld [vmem:[#allocation3 + $0xf0] sm:$0xff]
          %v1801 = vld [vmem:[#allocation3 + $0xf8] sm:$0xff]
          %v1802 = vld [vmem:[#allocation12] sm:$0xff]
          %v1803 = vld [vmem:[#allocation12 + $0x8] sm:$0xff]
          %v1804 = vld [vmem:[#allocation12 + $0x10] sm:$0xff]
          %v1805 = vld [vmem:[#allocation12 + $0x18] sm:$0xff]
          %v1806 = vld [vmem:[#allocation12 + $0x20] sm:$0xff]
          %v1807 = vld [vmem:[#allocation12 + $0x28] sm:$0xff]
          %v1808 = vld [vmem:[#allocation12 + $0x30] sm:$0xff]
          %v1809 = vld [vmem:[#allocation12 + $0x38] sm:$0xff]
          %v1810 = vld [vmem:[#allocation12 + $0x40] sm:$0xff]
          %v1811 = vld [vmem:[#allocation12 + $0x48] sm:$0xff]
          %v1812 = vld [vmem:[#allocation12 + $0x50] sm:$0xff]
          %v1813 = vld [vmem:[#allocation12 + $0x58] sm:$0xff]
          %v1814 = vld [vmem:[#allocation12 + $0x60] sm:$0xff]
          %v1815 = vld [vmem:[#allocation12 + $0x68] sm:$0xff]
          %v1816 = vld [vmem:[#allocation12 + $0x70] sm:$0xff]
          %v1817 = vld [vmem:[#allocation12 + $0x78] sm:$0xff]
          %v1818 = vld [vmem:[%s270] sm:$0xff]
          %v1819 = vld [vmem:[%s270 + $0x8] sm:$0xff]
          %v1820 = vld [vmem:[%s270 + $0x10] sm:$0xff]
          %v1821 = vld [vmem:[%s270 + $0x18] sm:$0xff]
          %v1822 = vld [vmem:[%s270 + $0x20] sm:$0xff]
          %v1823 = vld [vmem:[%s270 + $0x28] sm:$0xff]
          %v1824 = vld [vmem:[%s270 + $0x30] sm:$0xff]
          %v1825 = vld [vmem:[%s270 + $0x38] sm:$0xff]
          %v1826 = vld [vmem:[%s270 + $0x40] sm:$0xff]
          %v1827 = vld [vmem:[%s270 + $0x48] sm:$0xff]
          %v1828 = vld [vmem:[%s270 + $0x50] sm:$0xff]
          %v1829 = vld [vmem:[%s270 + $0x58] sm:$0xff]
          %v1830 = vld [vmem:[%s270 + $0x60] sm:$0xff]
          %v1831 = vld [vmem:[%s270 + $0x68] sm:$0xff]
          %v1832 = vld [vmem:[%s270 + $0x70] sm:$0xff]
          %v1833 = vld [vmem:[%s270 + $0x78] sm:$0xff]
          %v1834 = vld [vmem:[%s270 + $0x80] sm:$0xff]
          %v1835 = vld [vmem:[%s270 + $0x88] sm:$0xff]
          %v1836 = vld [vmem:[%s270 + $0x90] sm:$0xff]
          %v1837 = vld [vmem:[%s270 + $0x98] sm:$0xff]
          %v1838 = vld [vmem:[%s270 + $0xa0] sm:$0xff]
          %v1839 = vld [vmem:[%s270 + $0xa8] sm:$0xff]
          %v1840 = vld [vmem:[%s270 + $0xb0] sm:$0xff]
          %v1841 = vld [vmem:[%s270 + $0xb8] sm:$0xff]
          %v1842 = vld [vmem:[%s270 + $0xc0] sm:$0xff]
          %v1843 = vld [vmem:[%s270 + $0xc8] sm:$0xff]
          %v1844 = vld [vmem:[%s270 + $0xd0] sm:$0xff]
          %v1845 = vld [vmem:[%s270 + $0xd8] sm:$0xff]
          %v1846 = vld [vmem:[%s270 + $0xe0] sm:$0xff]
          %v1847 = vld [vmem:[%s270 + $0xe8] sm:$0xff]
          %v1848 = vld [vmem:[%s270 + $0xf0] sm:$0xff]
          %v1849 = vld [vmem:[%s270 + $0xf8] sm:$0xff]
          %1850 = vmatprep.subr.mxu0 0.0
          %1851 = vmatpush1.msra.mxu0 %v1802
          %1852 = vmatprep.subr.mxu0 0.0
          %1853 = vmatpush1.msra.mxu0 %v1803
          %1854 = vmatprep.subr.mxu0 0.0
          %1855 = vmatpush1.msra.mxu0 %v1804
          %1856 = vmatprep.subr.mxu0 0.0
          %1857 = vmatpush1.msra.mxu0 %v1805
          %1858 = vmatprep.subr.mxu0 0.0
          %1859 = vmatpush1.msra.mxu0 %v1806
          %1860 = vmatprep.subr.mxu0 0.0
          %1861 = vmatpush1.msra.mxu0 %v1807
          %1862 = vmatprep.subr.mxu0 0.0
          %1863 = vmatpush1.msra.mxu0 %v1808
          %1864 = vmatprep.subr.mxu0 0.0
          %1865 = vmatpush1.msra.mxu0 %v1809
          %1866 = vmatprep.subr.mxu0 0.0
          %1867 = vmatpush1.msra.mxu0 %v1810
          %1868 = vmatprep.subr.mxu0 0.0
          %1869 = vmatpush1.msra.mxu0 %v1811
          %1870 = vmatprep.subr.mxu0 0.0
          %1871 = vmatpush1.msra.mxu0 %v1812
          %1872 = vmatprep.subr.mxu0 0.0
          %1873 = vmatpush1.msra.mxu0 %v1813
          %1874 = vmatprep.subr.mxu0 0.0
          %1875 = vmatpush1.msra.mxu0 %v1814
          %1876 = vmatprep.subr.mxu0 0.0
          %1877 = vmatpush1.msra.mxu0 %v1815
          %1878 = vmatprep.subr.mxu0 0.0
          %1879 = vmatpush1.msra.mxu0 %v1816
          %1880 = vmatprep.subr.mxu0 0.0
          %1881 = vmatpush1.msra.mxu0 %v1817
          %1882 = vmatprep.subr.mxu0 0.0
          %1883 = vmatpush1.msra.mxu0 0.0
          %1884 = vmatprep.subr.mxu0 0.0
          %1885 = vmatpush1.msra.mxu0 0.0
          %1886 = vmatprep.subr.mxu0 0.0
          %1887 = vmatpush1.msra.mxu0 0.0
          %1888 = vmatprep.subr.mxu0 0.0
          %1889 = vmatpush1.msra.mxu0 0.0
          %1890 = vmatprep.subr.mxu0 0.0
          %1891 = vmatpush1.msra.mxu0 0.0
          %1892 = vmatprep.subr.mxu0 0.0
          %1893 = vmatpush1.msra.mxu0 0.0
          %1894 = vmatprep.subr.mxu0 0.0
          %1895 = vmatpush1.msra.mxu0 0.0
          %1896 = vmatprep.subr.mxu0 0.0
          %1897 = vmatpush1.msra.mxu0 0.0
          %1898 = vmatprep.subr.mxu0 0.0
          %1899 = vmatpush1.msra.mxu0 0.0
          %1900 = vmatprep.subr.mxu0 0.0
          %1901 = vmatpush1.msra.mxu0 0.0
          %1902 = vmatprep.subr.mxu0 0.0
          %1903 = vmatpush1.msra.mxu0 0.0
          %1904 = vmatprep.subr.mxu0 0.0
          %1905 = vmatpush1.msra.mxu0 0.0
          %1906 = vmatprep.subr.mxu0 0.0
          %1907 = vmatpush1.msra.mxu0 0.0
          %1908 = vmatprep.subr.mxu0 0.0
          %1909 = vmatpush1.msra.mxu0 0.0
          %1910 = vmatprep.subr.mxu0 0.0
          %1911 = vmatpush1.msra.mxu0 0.0
          %1912 = vmatprep.subr.mxu0 0.0
          %1913 = vmatpush1.msra.mxu0 0.0
          %1914 = vmatprep.mubr.f32.mxu0 0.0
          %1915 = vmatmul.mubr.f32.gmra.mrb[0].mxu0 %v1770
          %v1916 = vpop.f32.mrb[0].mxu0
          %v1917 = vadd.f32 %v1818, %v1916
          %v1918 = vpop.f32.mrb[0].mxu0
          %1919 = vmatprep.mubr.f32.mxu0 0.0
          %1920 = vmatmul.mubr.f32.gmra.mrb[0].mxu0 %v1771
          %v1921 = vpop.f32.mrb[0].mxu0
          %v1922 = vadd.f32 %v1819, %v1921
          %v1923 = vpop.f32.mrb[0].mxu0
          %1924 = vmatprep.mubr.f32.mxu0 0.0
          %1925 = vmatmul.mubr.f32.gmra.mrb[0].mxu0 %v1772
          %v1926 = vpop.f32.mrb[0].mxu0
          %v1927 = vadd.f32 %v1820, %v1926
          %v1928 = vpop.f32.mrb[0].mxu0
          %1929 = vmatprep.mubr.f32.mxu0 0.0
          %1930 = vmatmul.mubr.f32.gmra.mrb[0].mxu0 %v1773
          %v1931 = vpop.f32.mrb[0].mxu0
          %v1932 = vadd.f32 %v1821, %v1931
          %v1933 = vpop.f32.mrb[0].mxu0
          %1934 = vmatprep.mubr.f32.mxu0 0.0
          %1935 = vmatmul.mubr.f32.gmra.mrb[0].mxu0 %v1774
          %v1936 = vpop.f32.mrb[0].mxu0
          %v1937 = vadd.f32 %v1822, %v1936
          %v1938 = vpop.f32.mrb[0].mxu0
          %1939 = vmatprep.mubr.f32.mxu0 0.0
          %1940 = vmatmul.mubr.f32.gmra.mrb[0].mxu0 %v1775
          %v1941 = vpop.f32.mrb[0].mxu0
          %v1942 = vadd.f32 %v1823, %v1941
          %v1943 = vpop.f32.mrb[0].mxu0
          %1944 = vmatprep.mubr.f32.mxu0 0.0
          %1945 = vmatmul.mubr.f32.gmra.mrb[0].mxu0 %v1776
          %v1946 = vpop.f32.mrb[0].mxu0
          %v1947 = vadd.f32 %v1824, %v1946
          %v1948 = vpop.f32.mrb[0].mxu0
          %1949 = vmatprep.mubr.f32.mxu0 0.0
          %1950 = vmatmul.mubr.f32.gmra.mrb[0].mxu0 %v1777
          %v1951 = vpop.f32.mrb[0].mxu0
          %v1952 = vadd.f32 %v1825, %v1951
          %v1953 = vpop.f32.mrb[0].mxu0
          %1954 = vmatprep.mubr.f32.mxu0 0.0
          %1955 = vmatmul.mubr.f32.gmra.mrb[0].mxu0 %v1778
          %v1956 = vpop.f32.mrb[0].mxu0
          %v1957 = vadd.f32 %v1826, %v1956
          %v1958 = vpop.f32.mrb[0].mxu0
          %1959 = vmatprep.mubr.f32.mxu0 0.0
          %1960 = vmatmul.mubr.f32.gmra.mrb[0].mxu0 %v1779
          %v1961 = vpop.f32.mrb[0].mxu0
          %v1962 = vadd.f32 %v1827, %v1961
          %v1963 = vpop.f32.mrb[0].mxu0
          %1964 = vmatprep.mubr.f32.mxu0 0.0
          %1965 = vmatmul.mubr.f32.gmra.mrb[0].mxu0 %v1780
          %v1966 = vpop.f32.mrb[0].mxu0
          %v1967 = vadd.f32 %v1828, %v1966
          %v1968 = vpop.f32.mrb[0].mxu0
          %1969 = vmatprep.mubr.f32.mxu0 0.0
          %1970 = vmatmul.mubr.f32.gmra.mrb[0].mxu0 %v1781
          %v1971 = vpop.f32.mrb[0].mxu0
          %v1972 = vadd.f32 %v1829, %v1971
          %v1973 = vpop.f32.mrb[0].mxu0
          %1974 = vmatprep.mubr.f32.mxu0 0.0
          %1975 = vmatmul.mubr.f32.gmra.mrb[0].mxu0 %v1782
          %v1976 = vpop.f32.mrb[0].mxu0
          %v1977 = vadd.f32 %v1830, %v1976
          %v1978 = vpop.f32.mrb[0].mxu0
          %1979 = vmatprep.mubr.f32.mxu0 0.0
          %1980 = vmatmul.mubr.f32.gmra.mrb[0].mxu0 %v1783
          %v1981 = vpop.f32.mrb[0].mxu0
          %v1982 = vadd.f32 %v1831, %v1981
          %v1983 = vpop.f32.mrb[0].mxu0
          %1984 = vmatprep.mubr.f32.mxu0 0.0
          %1985 = vmatmul.mubr.f32.gmra.mrb[0].mxu0 %v1784
          %v1986 = vpop.f32.mrb[0].mxu0
          %v1987 = vadd.f32 %v1832, %v1986
          %v1988 = vpop.f32.mrb[0].mxu0
          %1989 = vmatprep.mubr.f32.mxu0 0.0
          %1990 = vmatmul.mubr.f32.gmra.mrb[0].mxu0 %v1785
          %v1991 = vpop.f32.mrb[0].mxu0
          %v1992 = vadd.f32 %v1833, %v1991
          %v1993 = vpop.f32.mrb[0].mxu0
          %1994 = vmatprep.mubr.f32.mxu0 0.0
          %1995 = vmatmul.mubr.f32.gmra.mrb[0].mxu0 %v1786
          %v1996 = vpop.f32.mrb[0].mxu0
          %v1997 = vadd.f32 %v1834, %v1996
          %v1998 = vpop.f32.mrb[0].mxu0
          %1999 = vmatprep.mubr.f32.mxu0 0.0
          %2000 = vmatmul.mubr.f32.gmra.mrb[0].mxu0 %v1787
          %v2001 = vpop.f32.mrb[0].mxu0
          %v2002 = vadd.f32 %v1835, %v2001
          %v2003 = vpop.f32.mrb[0].mxu0
          %2004 = vmatprep.mubr.f32.mxu0 0.0
          %2005 = vmatmul.mubr.f32.gmra.mrb[0].mxu0 %v1788
          %v2006 = vpop.f32.mrb[0].mxu0
          %v2007 = vadd.f32 %v1836, %v2006
          %v2008 = vpop.f32.mrb[0].mxu0
          %2009 = vmatprep.mubr.f32.mxu0 0.0
          %2010 = vmatmul.mubr.f32.gmra.mrb[0].mxu0 %v1789
          %v2011 = vpop.f32.mrb[0].mxu0
          %v2012 = vadd.f32 %v1837, %v2011
          %v2013 = vpop.f32.mrb[0].mxu0
          %2014 = vmatprep.mubr.f32.mxu0 0.0
          %2015 = vmatmul.mubr.f32.gmra.mrb[0].mxu0 %v1790
          %v2016 = vpop.f32.mrb[0].mxu0
          %v2017 = vadd.f32 %v1838, %v2016
          %v2018 = vpop.f32.mrb[0].mxu0
          %2019 = vmatprep.mubr.f32.mxu0 0.0
          %2020 = vmatmul.mubr.f32.gmra.mrb[0].mxu0 %v1791
          %v2021 = vpop.f32.mrb[0].mxu0
          %v2022 = vadd.f32 %v1839, %v2021
          %v2023 = vpop.f32.mrb[0].mxu0
          %2024 = vmatprep.mubr.f32.mxu0 0.0
          %2025 = vmatmul.mubr.f32.gmra.mrb[0].mxu0 %v1792
          %v2026 = vpop.f32.mrb[0].mxu0
          %v2027 = vadd.f32 %v1840, %v2026
          %v2028 = vpop.f32.mrb[0].mxu0
          %2029 = vmatprep.mubr.f32.mxu0 0.0
          %2030 = vmatmul.mubr.f32.gmra.mrb[0].mxu0 %v1793
          %v2031 = vpop.f32.mrb[0].mxu0
          %v2032 = vadd.f32 %v1841, %v2031
          %v2033 = vpop.f32.mrb[0].mxu0
          %2034 = vmatprep.mubr.f32.mxu0 0.0
          %2035 = vmatmul.mubr.f32.gmra.mrb[0].mxu0 %v1794
          %v2036 = vpop.f32.mrb[0].mxu0
          %v2037 = vadd.f32 %v1842, %v2036
          %v2038 = vpop.f32.mrb[0].mxu0
          %2039 = vmatprep.mubr.f32.mxu0 0.0
          %2040 = vmatmul.mubr.f32.gmra.mrb[0].mxu0 %v1795
          %v2041 = vpop.f32.mrb[0].mxu0
          %v2042 = vadd.f32 %v1843, %v2041
          %v2043 = vpop.f32.mrb[0].mxu0
          %2044 = vmatprep.mubr.f32.mxu0 0.0
          %2045 = vmatmul.mubr.f32.gmra.mrb[0].mxu0 %v1796
          %v2046 = vpop.f32.mrb[0].mxu0
          %v2047 = vadd.f32 %v1844, %v2046
          %v2048 = vpop.f32.mrb[0].mxu0
          %2049 = vmatprep.mubr.f32.mxu0 0.0
          %2050 = vmatmul.mubr.f32.gmra.mrb[0].mxu0 %v1797
          %v2051 = vpop.f32.mrb[0].mxu0
          %v2052 = vadd.f32 %v1845, %v2051
          %v2053 = vpop.f32.mrb[0].mxu0
          %2054 = vmatprep.mubr.f32.mxu0 0.0
          %2055 = vmatmul.mubr.f32.gmra.mrb[0].mxu0 %v1798
          %v2056 = vpop.f32.mrb[0].mxu0
          %v2057 = vadd.f32 %v1846, %v2056
          %v2058 = vpop.f32.mrb[0].mxu0
          %2059 = vmatprep.mubr.f32.mxu0 0.0
          %2060 = vmatmul.mubr.f32.gmra.mrb[0].mxu0 %v1799
          %v2061 = vpop.f32.mrb[0].mxu0
          %v2062 = vadd.f32 %v1847, %v2061
          %v2063 = vpop.f32.mrb[0].mxu0
          %2064 = vmatprep.mubr.f32.mxu0 0.0
          %2065 = vmatmul.mubr.f32.gmra.mrb[0].mxu0 %v1800
          %v2066 = vpop.f32.mrb[0].mxu0
          %v2067 = vadd.f32 %v1848, %v2066
          %v2068 = vpop.f32.mrb[0].mxu0
          %2069 = vmatprep.mubr.f32.mxu0 0.0
          %2070 = vmatmul.mubr.f32.gmra.mrb[0].mxu0 %v1801
          %v2071 = vpop.f32.mrb[0].mxu0
          %v2072 = vadd.f32 %v1849, %v2071
          %v2073 = vpop.f32.mrb[0].mxu0
          %2074 = vdwg.mxu0
          %2075 = vst [vmem:[%s312] sm:$0xff] %v1917
          %2076 = vst [vmem:[%s312 + $0x8] sm:$0xff] %v1922
          %2077 = vst [vmem:[%s312 + $0x10] sm:$0xff] %v1927
          %2078 = vst [vmem:[%s312 + $0x18] sm:$0xff] %v1932
          %2079 = vst [vmem:[%s312 + $0x20] sm:$0xff] %v1937
          %2080 = vst [vmem:[%s312 + $0x28] sm:$0xff] %v1942
          %2081 = vst [vmem:[%s312 + $0x30] sm:$0xff] %v1947
          %2082 = vst [vmem:[%s312 + $0x38] sm:$0xff] %v1952
          %2083 = vst [vmem:[%s312 + $0x40] sm:$0xff] %v1957
          %2084 = vst [vmem:[%s312 + $0x48] sm:$0xff] %v1962
          %2085 = vst [vmem:[%s312 + $0x50] sm:$0xff] %v1967
          %2086 = vst [vmem:[%s312 + $0x58] sm:$0xff] %v1972
          %2087 = vst [vmem:[%s312 + $0x60] sm:$0xff] %v1977
          %2088 = vst [vmem:[%s312 + $0x68] sm:$0xff] %v1982
          %2089 = vst [vmem:[%s312 + $0x70] sm:$0xff] %v1987
          %2090 = vst [vmem:[%s312 + $0x78] sm:$0xff] %v1992
          %2091 = vst [vmem:[%s312 + $0x80] sm:$0xff] %v1997
          %2092 = vst [vmem:[%s312 + $0x88] sm:$0xff] %v2002
          %2093 = vst [vmem:[%s312 + $0x90] sm:$0xff] %v2007
          %2094 = vst [vmem:[%s312 + $0x98] sm:$0xff] %v2012
          %2095 = vst [vmem:[%s312 + $0xa0] sm:$0xff] %v2017
          %2096 = vst [vmem:[%s312 + $0xa8] sm:$0xff] %v2022
          %2097 = vst [vmem:[%s312 + $0xb0] sm:$0xff] %v2027
          %2098 = vst [vmem:[%s312 + $0xb8] sm:$0xff] %v2032
          %2099 = vst [vmem:[%s312 + $0xc0] sm:$0xff] %v2037
          %2100 = vst [vmem:[%s312 + $0xc8] sm:$0xff] %v2042
          %2101 = vst [vmem:[%s312 + $0xd0] sm:$0xff] %v2047
          %2102 = vst [vmem:[%s312 + $0xd8] sm:$0xff] %v2052
          %2103 = vst [vmem:[%s312 + $0xe0] sm:$0xff] %v2057
          %2104 = vst [vmem:[%s312 + $0xe8] sm:$0xff] %v2062
          %2105 = vst [vmem:[%s312 + $0xf0] sm:$0xff] %v2067
          %2106 = vst [vmem:[%s312 + $0xf8] sm:$0xff] %v2072
        $region76: #{tpu_custom_call.1} parent=39 // pred_fallthru
          _
        %s2107 = sand.u32 %s154, 1
        %s2108 = scalar_lea.sflag [#allocation6], %s2107
        %s2109 = sand.u32 %s154, 1
        %s2110 = smul.addr %s2109, 256
        %s2111 = scalar_lea.vmem [#allocation13], %s2110
        // Predicated region
        $region77: #{tpu_custom_call.1} parent=39 // pred_check
          %p2112 = pneg %p164
        $region78: #{tpu_custom_call.1} parent=39 // pred_check_branch
          %2114 = sbr.rel (%p2112) target = $region80
        $region79: #{tpu_custom_call.1} parent=39 // pred_region
          %s2116 = ssub.s32 4096, 4096
          %2117 = vsyncadd %s2108, %s2116
          %s2118 = smul.addr %s28, 32
          %s2119 = smul.addr %s2118, 128
          %s2120 = scalar_lea.hbm %s5, %s2119
          %s2121 = sshll.u32 %s2111, 4
          %s2122 = int_to_ptr.vmem [resolvable:$true] %s2121
          %2127 = dma.vmem_to_hbm [thread:$0]  %s2122, 4096, %s2120, %s2108, 128, 128, 8
        $region80: #{tpu_custom_call.1} parent=39 // pred_fallthru
          _
      $region40: #{tpu_custom_call.1} parent=5 // pred_fallthru
        _
      %p2128 = scmp.le.s32.totalorder 2, %s19
      // Predicated region
      $region81: #{tpu_custom_call.1} parent=5 // pred_check
        %p2129 = pneg %p2128
      $region82: #{tpu_custom_call.1} parent=5 // pred_check_branch
        %2131 = sbr.rel (%p2129) target = $region84
      $region83: #{tpu_custom_call.1} parent=5 // pred_region
        %s2132 = ssub.s32 %s19, 2
        // Predicated region
        $region85: #{tpu_custom_call.1} parent=83 // pred_check
          %p2133 = pneg %p170
        $region86: #{tpu_custom_call.1} parent=83 // pred_check_branch
          %2135 = sbr.rel (%p2133) target = $region88
        $region87: #{tpu_custom_call.1} parent=83 // pred_region
          %s2136 = sand.u32 %s155, 1
          %s2137 = scalar_lea.sflag [#allocation6], %s2136
          %s2138 = sand.u32 %s155, 1
          %s2139 = smul.addr %s2138, 256
          %s2140 = scalar_lea.vmem [#allocation13], %s2139
          %2141 = dma.done %s2137, 4096
        $region88: #{tpu_custom_call.1} parent=83 // pred_fallthru
          _
      $region84: #{tpu_custom_call.1} parent=5 // pred_fallthru
        _
    $region6: #{tpu_custom_call.1} parent=1 // loop_footer
      %s23 = sadd.s32 1, %s19
    $region7: #{tpu_custom_call.1} parent=1 // loop_footer_branch
      %18 = sbr.rel target = $region3
    $region8: #{tpu_custom_call.1} parent=1 // loop_exit
      _
    %2142 = vsyncpa [#allocation5], 1
    %s2143 = scalar_lea.sflag [#allocation5], 1
    %2144 = vsyncpa %s2143, 1
    %2145 = vsyncpa [#allocation8], 1
    %2146 = vsyncpa [#allocation11], 1
    %2147 = vsyncpa [#allocation6], 1
    %s2148 = scalar_lea.sflag [#allocation6], 1
    %2149 = vsyncpa %s2148, 1

</llo_original>
